<compile_context>
chip_gen: v7x
topology: tpu7x:2x2x1
jax: 0.10.0
libtpu: 0.0.40
codegen_flags: <defaults>
</compile_context>

<pallas_src>
import functools

import jax
import jax.numpy as jnp
import numpy as np
from jax.experimental import pallas as pl
from jax.experimental.pallas import tpu as pltpu


# ---------------------------------------------------------------------------
# In-kernel helpers (shared by both paths)
# ---------------------------------------------------------------------------
def _shift_right_zero(a):
    """a[:, l] -> a[:, l-1], zero at column 0 (2-D, lane axis last)."""
    l = a.shape[1]
    lane = jax.lax.broadcasted_iota(jnp.int32, a.shape, 1)
    return jnp.where(lane == 0, 0.0, pltpu.roll(a, shift=1, axis=1))


def _shift_left_zero(a):
    """a[:, l] -> a[:, l+1], zero at column L-1 (2-D, lane axis last)."""
    l = a.shape[1]
    lane = jax.lax.broadcasted_iota(jnp.int32, a.shape, 1)
    return jnp.where(lane == l - 1, 0.0, pltpu.roll(a, shift=l - 1, axis=1))


def _conv_sample(x_b, w1_ref, b1_ref, w2_ref, b2_ref):
    """x_b: (C, L) f32 for one sample -> relu(conv2(relu(conv1(x)))) as (1, L) f32."""
    # In-kernel halos: +-1 lane shifts of the small raw input (C rows only).
    x_prev = _shift_right_zero(x_b).astype(jnp.bfloat16)
    x_next = _shift_left_zero(x_b).astype(jnp.bfloat16)
    x_c = x_b.astype(jnp.bfloat16)

    # conv1: three taps as three (64,C)@(C,L) bf16 MXU dots, f32 accumulation.
    # TODO(synk): fold the 3 taps into one (64,3C)@(3C,L) dot for very long L.
    acc = jnp.dot(w1_ref[0], x_prev, preferred_element_type=jnp.float32)
    acc = acc + jnp.dot(w1_ref[1], x_c, preferred_element_type=jnp.float32)
    acc = acc + jnp.dot(w1_ref[2], x_next, preferred_element_type=jnp.float32)
    h1 = jnp.maximum(acc + b1_ref[...], 0.0).astype(jnp.bfloat16)       # (64, L)

    # conv2: single folded (3,64)@(64,L) dot; shift the three tap rows by -1/0/+1
    # (linearity => equivalent to shifting the inputs, but only on (1,L) rows).
    r = jnp.dot(w2_ref[...], h1, preferred_element_type=jnp.float32)    # (3, L)
    h2 = (_shift_right_zero(r[0:1, :]) + r[1:2, :]
          + _shift_left_zero(r[2:3, :]) + b2_ref[...])
    return jnp.maximum(h2, 0.0)                                          # (1, L) f32


def _fc_stack(z, w1_ref, b1_ref, w2_ref, b2_ref, w3_ref, b3_ref):
    """z: (N, 128) f32 -> logits (N, out_pad) f32. bf16 MXU operands, f32 math."""
    h = jnp.dot(z.astype(jnp.bfloat16), w1_ref[...],
                preferred_element_type=jnp.float32) + b1_ref[...]
    h = jnp.maximum(h, 0.0)                                    # ReLU
    h = jnp.dot(h.astype(jnp.bfloat16), w2_ref[...],
                preferred_element_type=jnp.float32) + b2_ref[...]
    h = jnp.where(h >= 0.0, h, 0.01 * h)                       # LeakyReLU(0.01)
    return jnp.dot(h.astype(jnp.bfloat16), w3_ref[...],
                   preferred_element_type=jnp.float32) + b3_ref[...]


# ---------------------------------------------------------------------------
# Path 1: single fully-fused kernel (small N*L — everything VMEM resident)
# ---------------------------------------------------------------------------
def _fused_kernel(x_ref, pmat_ref, w1_ref, b1_ref, w2_ref, b2_ref,
                  g_ref, bb_ref, fw1_ref, fb1_ref, fw2_ref, fb2_ref,
                  fw3_ref, fb3_ref, o_ref, pooled_scr):
    n, _, l = x_ref.shape
    pmat = pmat_ref[...]                                       # (L, 128) bf16
    tot = jnp.float32(0.0)
    tot_sq = jnp.float32(0.0)
    for b in range(n):                                         # small N, unrolled
        h2 = _conv_sample(x_ref[b], w1_ref, b1_ref, w2_ref, b2_ref)   # (1, L)
        tot = tot + jnp.sum(h2)
        tot_sq = tot_sq + jnp.sum(h2 * h2)
        pooled_scr[b:b + 1, :] = jnp.dot(h2.astype(jnp.bfloat16), pmat,
                                         preferred_element_type=jnp.float32)

    # BatchNorm1d(1): training-mode batch statistics (one pass, biased variance,
    # eps=1e-5), applied AFTER pooling (exact: BN is a scalar affine and the
    # pool bins are plain means, so BN commutes with pooling).
    # TODO(synk): eval-mode (running-stats) BatchNorm is not implemented.
    inv_cnt = 1.0 / (n * l)
    mean = tot * inv_cnt
    var = tot_sq * inv_cnt - mean * mean
    scale = jax.lax.rsqrt(var + 1e-5) * g_ref[...]             # (1, 1)
    shift = bb_ref[...] - mean * scale
    z = pooled_scr[...] * scale + shift                        # (N, 128)
    o_ref[...] = _fc_stack(z, fw1_ref, fb1_ref, fw2_ref, fb2_ref,
                           fw3_ref, fb3_ref).astype(o_ref.dtype)


def _forward_fused(params, x):
    n, _, l = x.shape
    out_pad = params["fc3_b"].shape[1]
    return pl.pallas_call(
        _fused_kernel,
        out_shape=jax.ShapeDtypeStruct((n, out_pad), jnp.float32),
        in_specs=[pl.BlockSpec(memory_space=pltpu.MemorySpace.VMEM)] * 14,
        out_specs=pl.BlockSpec(memory_space=pltpu.MemorySpace.VMEM),
        scratch_shapes=[pltpu.VMEM((n, 128), jnp.float32)],
        compiler_params=pltpu.CompilerParams(vmem_limit_bytes=32 * 1024 * 1024),
    )(x, _pool_matrix(l), params["w1"], params["b1"], params["w2"], params["b2"],
      params["bn_g"], params["bn_b"],
      params["fc1_w"], params["fc1_b"], params["fc2_w"], params["fc2_b"],
      params["fc3_w"], params["fc3_b"])


# ---------------------------------------------------------------------------
# Path 2: batch-blocked conv+pool kernel  +  tiny BN-affine + FC kernel
# ---------------------------------------------------------------------------
def _conv_pool_kernel(x_ref, pmat_ref, w1_ref, b1_ref, w2_ref, b2_ref,
                      pooled_ref, psq_ref):
    bblk = x_ref.shape[0]
    pmat = pmat_ref[...]                                       # (L, 128) bf16
    for b in range(bblk):                                      # small block, unrolled
        h2 = _conv_sample(x_ref[b], w1_ref, b1_ref, w2_ref, b2_ref)   # (1, L)
        pooled_ref[b] = jnp.dot(h2.astype(jnp.bfloat16), pmat,
                                preferred_element_type=jnp.float32)
        psq_ref[b] = jnp.dot((h2 * h2).astype(jnp.bfloat16), pmat,
                             preferred_element_type=jnp.float32)


def _bn_fc_kernel(pooled_ref, psq_ref, g_ref, bb_ref, fw1_ref, fb1_ref,
                  fw2_ref, fb2_ref, fw3_ref, fb3_ref, o_ref):
    pooled = pooled_ref[...]                                   # (N, 128) f32
    inv_cnt = 1.0 / (pooled.shape[0] * pooled.shape[1])
    mean = jnp.sum(pooled) * inv_cnt      # == mean(h2): pool bins are plain means
    ex2 = jnp.sum(psq_ref[...]) * inv_cnt  # == E[h2^2]
    var = ex2 - mean * mean
    scale = jax.lax.rsqrt(var + 1e-5) * g_ref[...]
    shift = bb_ref[...] - mean * scale
    z = pooled * scale + shift
    o_ref[...] = _fc_stack(z, fw1_ref, fb1_ref, fw2_ref, fb2_ref,
                           fw3_ref, fb3_ref).astype(o_ref.dtype)


def _pick_batch_block(n):
    """Rows per grid step: amortize step overhead, keep >=2 steps for v7x megacore."""
    if n % 8 == 0 and n >= 16:
        return 8
    if n % 2 == 0:
        return min(8, n // 2)
    return 1


def _forward_two_stage(params, x):
    n, c, l = x.shape
    out_pad = params["fc3_b"].shape[1]
    bblk = _pick_batch_block(n)
    pmat = _pool_matrix(l)

    # Stage 1: conv1+ReLU+conv2+ReLU + pooled first/second moments per sample.
    # Only (N,1,128) rows ever reach HBM — the (N,L) feature map stays in VMEM.
    # TODO(synk): tile L with halos inside this kernel for very long sequences.
    pooled, psq = pl.pallas_call(
        _conv_pool_kernel,
        out_shape=(jax.ShapeDtypeStruct((n, 1, 128), jnp.float32),
                   jax.ShapeDtypeStruct((n, 1, 128), jnp.float32)),
        grid=(n // bblk,),
        in_specs=[
            pl.BlockSpec((bblk, c, l), lambda i: (i, 0, 0)),    # batch block of x (f32)
            pl.BlockSpec((l, 128), lambda i: (0, 0)),           # pooling matrix (resident)
            pl.BlockSpec((3, 64, c), lambda i: (0, 0, 0)),      # conv1 weight (resident)
            pl.BlockSpec((64, 1), lambda i: (0, 0)),            # conv1 bias
            pl.BlockSpec((3, 64), lambda i: (0, 0)),            # conv2 weight (folded taps)
            pl.BlockSpec((1, 1), lambda i: (0, 0)),             # conv2 bias
        ],
        out_specs=(pl.BlockSpec((bblk, 1, 128), lambda i: (i, 0, 0)),
                   pl.BlockSpec((bblk, 1, 128), lambda i: (i, 0, 0))),
        compiler_params=pltpu.CompilerParams(
            dimension_semantics=("parallel",),
            vmem_limit_bytes=32 * 1024 * 1024),
    )(x, pmat, params["w1"], params["b1"], params["w2"], params["b2"])

    # Stage 2: tiny — global BN affine (derived from pooled moments) + FC stack.
    return pl.pallas_call(
        _bn_fc_kernel,
        out_shape=jax.ShapeDtypeStruct((n, out_pad), jnp.float32),
        in_specs=[pl.BlockSpec(memory_space=pltpu.MemorySpace.VMEM)] * 10,
        out_specs=pl.BlockSpec(memory_space=pltpu.MemorySpace.VMEM),
        compiler_params=pltpu.CompilerParams(vmem_limit_bytes=32 * 1024 * 1024),
    )(pooled.reshape(n, 128), psq.reshape(n, 128),
      params["bn_g"], params["bn_b"],
      params["fc1_w"], params["fc1_b"], params["fc2_w"], params["fc2_b"],
      params["fc3_w"], params["fc3_b"])


# ---------------------------------------------------------------------------
# Wrapper-level constants, parameters and forward
# ---------------------------------------------------------------------------
def _pool_matrix(l):
    """(L, 128) bf16 adaptive-avg-pool matrix (requires L % 128 == 0)."""
    pool = l // 128
    rows = jax.lax.broadcasted_iota(jnp.int32, (l, 128), 0)
    cols = jax.lax.broadcasted_iota(jnp.int32, (l, 128), 1)
    return jnp.where(rows // pool == cols, 1.0 / pool, 0.0).astype(jnp.bfloat16)


def init_params(key, input_channels, num_classes):
    ks = jax.random.split(key, 10)
    s = 0.05
    # PyTorch-layout draws (mirrors the nn.Module parameter shapes)
    w1 = jax.random.normal(ks[0], (64, input_channels, 3), jnp.float32) * s
    b1 = jax.random.normal(ks[1], (64,), jnp.float32) * s
    w2 = jax.random.normal(ks[2], (1, 64, 3), jnp.float32) * s
    b2 = jax.random.normal(ks[3], (1,), jnp.float32) * s
    fc1_w = jax.random.normal(ks[4], (512, 128), jnp.float32) * s
    fc1_b = jax.random.normal(ks[5], (512,), jnp.float32) * s
    fc2_w = jax.random.normal(ks[6], (256, 512), jnp.float32) * s
    fc2_b = jax.random.normal(ks[7], (256,), jnp.float32) * s
    fc3_w = jax.random.normal(ks[8], (num_classes, 256), jnp.float32) * s
    fc3_b = jax.random.normal(ks[9], (num_classes,), jnp.float32) * s

    # Pre-transpose / pre-cast MXU operands to bf16, pre-pad fc3 to a
    # lane-dense 128-multiple output width.
    out_pad = 128 * ((num_classes + 127) // 128)
    fc3_wp = jnp.zeros((256, out_pad), jnp.float32).at[:, :num_classes].set(fc3_w.T)
    fc3_bp = jnp.zeros((1, out_pad), jnp.float32).at[:, :num_classes].set(fc3_b[None, :])
    return {
        "w1": jnp.transpose(w1, (2, 0, 1)).astype(jnp.bfloat16),   # (3, 64, C)
        "b1": b1.reshape(64, 1),
        "w2": jnp.transpose(w2[0], (1, 0)).astype(jnp.bfloat16),   # (3, 64) folded taps
        "b2": b2.reshape(1, 1),
        "bn_g": jnp.ones((1, 1), jnp.float32),                     # BatchNorm1d defaults
        "bn_b": jnp.zeros((1, 1), jnp.float32),
        "fc1_w": fc1_w.T.astype(jnp.bfloat16),                     # (128, 512)
        "fc1_b": fc1_b.reshape(1, 512),
        "fc2_w": fc2_w.T.astype(jnp.bfloat16),                     # (512, 256)
        "fc2_b": fc2_b.reshape(1, 256),
        "fc3_w": fc3_wp.astype(jnp.bfloat16),                      # (256, 128k) padded
        "fc3_b": fc3_bp,                                           # (1, 128k) padded
    }


_FUSED_MAX_ELEMS = 8 * 1024    # N*L below which the single fused kernel is used


@functools.partial(jax.jit, static_argnames=("num_classes",))
def language_classifier_forward(params, x, *, num_classes):
    """x: (N, C, L) float32 -> logits (N, num_classes). Requires L % 128 == 0."""
    n, _, l = x.shape
    if l % 128 != 0:
        # TODO(synk): non-uniform AdaptiveAvgPool bins (L % 128 != 0) unsupported.
        raise ValueError("AdaptiveAvgPool1d(128) kernel requires L % 128 == 0")
    if n * l <= _FUSED_MAX_ELEMS and n <= 16:
        logits_pad = _forward_fused(params, x)        # single kernel launch
    else:
        logits_pad = _forward_two_stage(params, x)    # conv+pool grid, tiny BN+FC
    return logits_pad[:, :num_classes]


# ---------------------------------------------------------------------------
# Pure-JAX reference (same stored weights, f32 math) for a sanity check
# ---------------------------------------------------------------------------
def _reference_forward(params, x, num_classes):
    n, _, l = x.shape
    w1 = params["w1"].astype(jnp.float32)          # (3, 64, C)
    w2 = params["w2"].astype(jnp.float32)          # (3, 64)
    xp = jnp.pad(x, ((0, 0), (0, 0), (1, 1)))
    h1 = sum(jnp.einsum("oc,ncl->nol", w1[k], xp[:, :, k:k + l]) for k in range(3))
    h1 = jax.nn.relu(h1 + params["b1"].reshape(1, 64, 1))
    h1p = jnp.pad(h1, ((0, 0), (0, 0), (1, 1)))
    h2 = sum(jnp.einsum("c,ncl->nl", w2[k], h1p[:, :, k:k + l]) for k in range(3))
    h2 = jax.nn.relu(h2 + params["b2"][0, 0])                      # (N, L)
    mean = jnp.mean(h2)
    var = jnp.mean((h2 - mean) ** 2)
    y = (h2 - mean) * jax.lax.rsqrt(var + 1e-5) * params["bn_g"][0, 0] + params["bn_b"][0, 0]
    pooled = jnp.mean(y.reshape(n, 128, l // 128), axis=-1)        # (N, 128)
    h = jax.nn.relu(pooled @ params["fc1_w"].astype(jnp.float32) + params["fc1_b"])
    h = h @ params["fc2_w"].astype(jnp.float32) + params["fc2_b"]
    h = jnp.where(h >= 0.0, h, 0.01 * h)
    out = h @ params["fc3_w"].astype(jnp.float32) + params["fc3_b"]
    return out[:, :num_classes]


if __name__ == "__main__":
    key = jax.random.PRNGKey(0)
    k1, k2, k3, k4 = jax.random.split(key, 4)

    # Config 1: shipped small size -> single fully-fused kernel path.
    batch, in_ch, seq, ncls = 2, 4, 256, 5
    params = init_params(k1, in_ch, ncls)
    x = jax.random.normal(k2, (batch, in_ch, seq), jnp.float32)
    logits = language_classifier_forward(params, x, num_classes=ncls)
    jax.block_until_ready(logits)
    assert logits.shape == (batch, ncls)
    ref = _reference_forward(params, x, ncls)
    np.testing.assert_allclose(np.asarray(logits), np.asarray(ref),
                               atol=3e-2, rtol=3e-2)

    # Config 2: larger size -> two-stage path (batch-blocked conv+pool grid,
    # tiny BN+FC kernel).  Tolerance covers the bf16 MXU-operand casts.
    batch2, in_ch2, seq2, ncls2 = 8, 3, 2048, 7
    params2 = init_params(k3, in_ch2, ncls2)
    x2 = jax.random.normal(k4, (batch2, in_ch2, seq2), jnp.float32)
    logits2 = language_classifier_forward(params2, x2, num_classes=ncls2)
    jax.block_until_ready(logits2)
    assert logits2.shape == (batch2, ncls2)
    ref2 = _reference_forward(params2, x2, ncls2)
    np.testing.assert_allclose(np.asarray(logits2), np.asarray(ref2),
                               atol=3e-2, rtol=3e-2)

    print("KERNEL_OK")
</pallas_src>

<mosaic_0001>
module attributes {stable_mosaic.version = 11 : i64} {
  func.func @_fused_kernel(%arg0: memref<2x4x256xf32, #tpu.memory_space<vmem>>, %arg1: memref<256x128xbf16, #tpu.memory_space<vmem>>, %arg2: memref<3x64x4xbf16, #tpu.memory_space<vmem>>, %arg3: memref<64x1xf32, #tpu.memory_space<vmem>>, %arg4: memref<3x64xbf16, #tpu.memory_space<vmem>>, %arg5: memref<1x1xf32, #tpu.memory_space<vmem>>, %arg6: memref<1x1xf32, #tpu.memory_space<vmem>>, %arg7: memref<1x1xf32, #tpu.memory_space<vmem>>, %arg8: memref<128x512xbf16, #tpu.memory_space<vmem>>, %arg9: memref<1x512xf32, #tpu.memory_space<vmem>>, %arg10: memref<512x256xbf16, #tpu.memory_space<vmem>>, %arg11: memref<1x256xf32, #tpu.memory_space<vmem>>, %arg12: memref<256x128xbf16, #tpu.memory_space<vmem>>, %arg13: memref<1x128xf32, #tpu.memory_space<vmem>>, %arg14: memref<2x128xf32, #tpu.memory_space<vmem>>, %arg15: memref<2x128xf32, #tpu.memory_space<vmem>>) attributes {dimension_semantics = [], scalar_prefetch = 0 : i64, scratch_operands = 1 : i64, tpu.core_type = #tpu.core_type<tc>} {
    %c0 = arith.constant 0 : index
    %c0_0 = arith.constant 0 : index
    %0 = vector.load %arg1[%c0, %c0_0] : memref<256x128xbf16, #tpu.memory_space<vmem>>, vector<256x128xbf16>
    %c0_1 = arith.constant 0 : index
    %c0_2 = arith.constant 0 : index
    %c0_3 = arith.constant 0 : index
    %1 = vector.load %arg0[%c0_1, %c0_2, %c0_3] : memref<2x4x256xf32, #tpu.memory_space<vmem>>, vector<1x4x256xf32>
    %2 = vector.shape_cast %1 : vector<1x4x256xf32> to vector<4x256xf32>
    %3 = tpu.iota {dimensions = array<i32: 1>} : vector<4x256xi32>
    %c0_i32 = arith.constant 0 : i32
    %4 = vector.broadcast %c0_i32 : i32 to vector<4x256xi32>
    %5 = arith.cmpi eq, %3, %4 : vector<4x256xi32>
    %c1_i32 = arith.constant 1 : i32
    %6 = tpu.dynamic_rotate %2 by %c1_i32 dim 1 : vector<4x256xf32>, i32 -> vector<4x256xf32>
    %cst = arith.constant 0.000000e+00 : f32
    %7 = vector.broadcast %cst : f32 to vector<4x256xf32>
    %8 = arith.select %5, %7, %6 : vector<4x256xi1>, vector<4x256xf32>
    %9 = arith.truncf %8 : vector<4x256xf32> to vector<4x256xbf16>
    %10 = tpu.iota {dimensions = array<i32: 1>} : vector<4x256xi32>
    %c255_i32 = arith.constant 255 : i32
    %11 = vector.broadcast %c255_i32 : i32 to vector<4x256xi32>
    %12 = arith.cmpi eq, %10, %11 : vector<4x256xi32>
    %c255_i32_4 = arith.constant 255 : i32
    %13 = tpu.dynamic_rotate %2 by %c255_i32_4 dim 1 : vector<4x256xf32>, i32 -> vector<4x256xf32>
    %cst_5 = arith.constant 0.000000e+00 : f32
    %14 = vector.broadcast %cst_5 : f32 to vector<4x256xf32>
    %15 = arith.select %12, %14, %13 : vector<4x256xi1>, vector<4x256xf32>
    %16 = arith.truncf %15 : vector<4x256xf32> to vector<4x256xbf16>
    %17 = arith.truncf %2 : vector<4x256xf32> to vector<4x256xbf16>
    %c0_6 = arith.constant 0 : index
    %c0_7 = arith.constant 0 : index
    %c0_8 = arith.constant 0 : index
    %18 = vector.load %arg2[%c0_6, %c0_7, %c0_8] : memref<3x64x4xbf16, #tpu.memory_space<vmem>>, vector<1x64x4xbf16>
    %19 = vector.shape_cast %18 : vector<1x64x4xbf16> to vector<64x4xbf16>
    %cst_9 = arith.constant dense<0.000000e+00> : vector<64x256xf32>
    %20 = tpu.matmul %19, %9, %cst_9 {dimension_numbers = #tpu.dot_dimension_numbers<[1], [0], [0], [1], [0, 0, 1, 1], [], []>} : vector<64x4xbf16>, vector<4x256xbf16>, vector<64x256xf32> -> vector<64x256xf32>
    %c1 = arith.constant 1 : index
    %c0_10 = arith.constant 0 : index
    %c0_11 = arith.constant 0 : index
    %21 = vector.load %arg2[%c1, %c0_10, %c0_11] : memref<3x64x4xbf16, #tpu.memory_space<vmem>>, vector<1x64x4xbf16>
    %22 = vector.shape_cast %21 : vector<1x64x4xbf16> to vector<64x4xbf16>
    %cst_12 = arith.constant dense<0.000000e+00> : vector<64x256xf32>
    %23 = tpu.matmul %22, %17, %cst_12 {dimension_numbers = #tpu.dot_dimension_numbers<[1], [0], [0], [1], [0, 0, 1, 1], [], []>} : vector<64x4xbf16>, vector<4x256xbf16>, vector<64x256xf32> -> vector<64x256xf32>
    %24 = arith.addf %20, %23 : vector<64x256xf32>
    %c2 = arith.constant 2 : index
    %c0_13 = arith.constant 0 : index
    %c0_14 = arith.constant 0 : index
    %25 = vector.load %arg2[%c2, %c0_13, %c0_14] : memref<3x64x4xbf16, #tpu.memory_space<vmem>>, vector<1x64x4xbf16>
    %26 = vector.shape_cast %25 : vector<1x64x4xbf16> to vector<64x4xbf16>
    %cst_15 = arith.constant dense<0.000000e+00> : vector<64x256xf32>
    %27 = tpu.matmul %26, %16, %cst_15 {dimension_numbers = #tpu.dot_dimension_numbers<[1], [0], [0], [1], [0, 0, 1, 1], [], []>} : vector<64x4xbf16>, vector<4x256xbf16>, vector<64x256xf32> -> vector<64x256xf32>
    %28 = arith.addf %24, %27 : vector<64x256xf32>
    %c0_16 = arith.constant 0 : index
    %c0_17 = arith.constant 0 : index
    %29 = vector.load %arg3[%c0_16, %c0_17] : memref<64x1xf32, #tpu.memory_space<vmem>>, vector<64x1xf32>
    %30 = vector.broadcast %29 : vector<64x1xf32> to vector<64x256xf32>
    %31 = arith.addf %28, %30 : vector<64x256xf32>
    %cst_18 = arith.constant 0.000000e+00 : f32
    %32 = vector.broadcast %cst_18 : f32 to vector<64x256xf32>
    %33 = arith.maximumf %31, %32 : vector<64x256xf32>
    %34 = arith.truncf %33 : vector<64x256xf32> to vector<64x256xbf16>
    %c0_19 = arith.constant 0 : index
    %c0_20 = arith.constant 0 : index
    %35 = vector.load %arg4[%c0_19, %c0_20] : memref<3x64xbf16, #tpu.memory_space<vmem>>, vector<3x64xbf16>
    %cst_21 = arith.constant dense<0.000000e+00> : vector<3x256xf32>
    %36 = tpu.matmul %35, %34, %cst_21 {dimension_numbers = #tpu.dot_dimension_numbers<[1], [0], [0], [1], [0, 0, 1, 1], [], []>} : vector<3x64xbf16>, vector<64x256xbf16>, vector<3x256xf32> -> vector<3x256xf32>
    %37 = vector.extract_strided_slice %36 {offsets = [0, 0], sizes = [1, 256], strides = [1, 1]} : vector<3x256xf32> to vector<1x256xf32>
    %38 = tpu.iota {dimensions = array<i32: 1>} : vector<1x256xi32>
    %c0_i32_22 = arith.constant 0 : i32
    %39 = vector.broadcast %c0_i32_22 : i32 to vector<1x256xi32>
    %40 = arith.cmpi eq, %38, %39 : vector<1x256xi32>
    %c1_i32_23 = arith.constant 1 : i32
    %41 = tpu.dynamic_rotate %37 by %c1_i32_23 dim 1 : vector<1x256xf32>, i32 -> vector<1x256xf32>
    %cst_24 = arith.constant 0.000000e+00 : f32
    %42 = vector.broadcast %cst_24 : f32 to vector<1x256xf32>
    %43 = arith.select %40, %42, %41 : vector<1x256xi1>, vector<1x256xf32>
    %44 = vector.extract_strided_slice %36 {offsets = [1, 0], sizes = [1, 256], strides = [1, 1]} : vector<3x256xf32> to vector<1x256xf32>
    %45 = arith.addf %43, %44 : vector<1x256xf32>
    %46 = vector.extract_strided_slice %36 {offsets = [2, 0], sizes = [1, 256], strides = [1, 1]} : vector<3x256xf32> to vector<1x256xf32>
    %47 = tpu.iota {dimensions = array<i32: 1>} : vector<1x256xi32>
    %c255_i32_25 = arith.constant 255 : i32
    %48 = vector.broadcast %c255_i32_25 : i32 to vector<1x256xi32>
    %49 = arith.cmpi eq, %47, %48 : vector<1x256xi32>
    %c255_i32_26 = arith.constant 255 : i32
    %50 = tpu.dynamic_rotate %46 by %c255_i32_26 dim 1 : vector<1x256xf32>, i32 -> vector<1x256xf32>
    %cst_27 = arith.constant 0.000000e+00 : f32
    %51 = vector.broadcast %cst_27 : f32 to vector<1x256xf32>
    %52 = arith.select %49, %51, %50 : vector<1x256xi1>, vector<1x256xf32>
    %53 = arith.addf %45, %52 : vector<1x256xf32>
    %c0_28 = arith.constant 0 : index
    %c0_29 = arith.constant 0 : index
    %54 = vector.load %arg5[%c0_28, %c0_29] : memref<1x1xf32, #tpu.memory_space<vmem>>, vector<1x1xf32>
    %55 = vector.broadcast %54 : vector<1x1xf32> to vector<1x256xf32>
    %56 = arith.addf %53, %55 : vector<1x256xf32>
    %cst_30 = arith.constant 0.000000e+00 : f32
    %57 = vector.broadcast %cst_30 : f32 to vector<1x256xf32>
    %58 = arith.maximumf %56, %57 : vector<1x256xf32>
    %59 = vector.shape_cast %58 : vector<1x256xf32> to vector<1x1x256xf32>
    %cst_31 = arith.constant dense<0.000000e+00> : vector<1xf32>
    %60 = vector.multi_reduction <add>, %59, %cst_31 [1, 2] : vector<1x1x256xf32> to vector<1xf32>
    %61 = vector.shape_cast %60 : vector<1xf32> to vector<1x1x1xf32>
    %62 = vector.extract %61[0, 0, 0] : f32 from vector<1x1x1xf32>
    %cst_32 = arith.constant 0.000000e+00 : f32
    %63 = arith.addf %cst_32, %62 : f32
    %64 = arith.mulf %58, %58 : vector<1x256xf32>
    %65 = vector.shape_cast %64 : vector<1x256xf32> to vector<1x1x256xf32>
    %cst_33 = arith.constant dense<0.000000e+00> : vector<1xf32>
    %66 = vector.multi_reduction <add>, %65, %cst_33 [1, 2] : vector<1x1x256xf32> to vector<1xf32>
    %67 = vector.shape_cast %66 : vector<1xf32> to vector<1x1x1xf32>
    %68 = vector.extract %67[0, 0, 0] : f32 from vector<1x1x1xf32>
    %cst_34 = arith.constant 0.000000e+00 : f32
    %69 = arith.addf %cst_34, %68 : f32
    %70 = arith.truncf %58 : vector<1x256xf32> to vector<1x256xbf16>
    %cst_35 = arith.constant dense<0.000000e+00> : vector<1x128xf32>
    %71 = tpu.matmul %70, %0, %cst_35 {dimension_numbers = #tpu.dot_dimension_numbers<[1], [0], [0], [1], [0, 0, 1, 1], [], []>} : vector<1x256xbf16>, vector<256x128xbf16>, vector<1x128xf32> -> vector<1x128xf32>
    %c0_36 = arith.constant 0 : index
    %c0_37 = arith.constant 0 : index
    %72 = vector.load %arg15[%c0_36, %c0_37] : memref<2x128xf32, #tpu.memory_space<vmem>>, vector<1x128xf32>
    tpu.vector_store %arg15[%c0_36, %c0_37], %71 {strides = array<i32>} : memref<2x128xf32, #tpu.memory_space<vmem>>, vector<1x128xf32>,
    %c1_38 = arith.constant 1 : index
    %c0_39 = arith.constant 0 : index
    %c0_40 = arith.constant 0 : index
    %73 = vector.load %arg0[%c1_38, %c0_39, %c0_40] : memref<2x4x256xf32, #tpu.memory_space<vmem>>, vector<1x4x256xf32>
    %74 = vector.shape_cast %73 : vector<1x4x256xf32> to vector<4x256xf32>
    %75 = tpu.iota {dimensions = array<i32: 1>} : vector<4x256xi32>
    %c0_i32_41 = arith.constant 0 : i32
    %76 = vector.broadcast %c0_i32_41 : i32 to vector<4x256xi32>
    %77 = arith.cmpi eq, %75, %76 : vector<4x256xi32>
    %c1_i32_42 = arith.constant 1 : i32
    %78 = tpu.dynamic_rotate %74 by %c1_i32_42 dim 1 : vector<4x256xf32>, i32 -> vector<4x256xf32>
    %cst_43 = arith.constant 0.000000e+00 : f32
    %79 = vector.broadcast %cst_43 : f32 to vector<4x256xf32>
    %80 = arith.select %77, %79, %78 : vector<4x256xi1>, vector<4x256xf32>
    %81 = arith.truncf %80 : vector<4x256xf32> to vector<4x256xbf16>
    %82 = tpu.iota {dimensions = array<i32: 1>} : vector<4x256xi32>
    %c255_i32_44 = arith.constant 255 : i32
    %83 = vector.broadcast %c255_i32_44 : i32 to vector<4x256xi32>
    %84 = arith.cmpi eq, %82, %83 : vector<4x256xi32>
    %c255_i32_45 = arith.constant 255 : i32
    %85 = tpu.dynamic_rotate %74 by %c255_i32_45 dim 1 : vector<4x256xf32>, i32 -> vector<4x256xf32>
    %cst_46 = arith.constant 0.000000e+00 : f32
    %86 = vector.broadcast %cst_46 : f32 to vector<4x256xf32>
    %87 = arith.select %84, %86, %85 : vector<4x256xi1>, vector<4x256xf32>
    %88 = arith.truncf %87 : vector<4x256xf32> to vector<4x256xbf16>
    %89 = arith.truncf %74 : vector<4x256xf32> to vector<4x256xbf16>
    %c0_47 = arith.constant 0 : index
    %c0_48 = arith.constant 0 : index
    %c0_49 = arith.constant 0 : index
    %90 = vector.load %arg2[%c0_47, %c0_48, %c0_49] : memref<3x64x4xbf16, #tpu.memory_space<vmem>>, vector<1x64x4xbf16>
    %91 = vector.shape_cast %90 : vector<1x64x4xbf16> to vector<64x4xbf16>
    %cst_50 = arith.constant dense<0.000000e+00> : vector<64x256xf32>
    %92 = tpu.matmul %91, %81, %cst_50 {dimension_numbers = #tpu.dot_dimension_numbers<[1], [0], [0], [1], [0, 0, 1, 1], [], []>} : vector<64x4xbf16>, vector<4x256xbf16>, vector<64x256xf32> -> vector<64x256xf32>
    %c1_51 = arith.constant 1 : index
    %c0_52 = arith.constant 0 : index
    %c0_53 = arith.constant 0 : index
    %93 = vector.load %arg2[%c1_51, %c0_52, %c0_53] : memref<3x64x4xbf16, #tpu.memory_space<vmem>>, vector<1x64x4xbf16>
    %94 = vector.shape_cast %93 : vector<1x64x4xbf16> to vector<64x4xbf16>
    %cst_54 = arith.constant dense<0.000000e+00> : vector<64x256xf32>
    %95 = tpu.matmul %94, %89, %cst_54 {dimension_numbers = #tpu.dot_dimension_numbers<[1], [0], [0], [1], [0, 0, 1, 1], [], []>} : vector<64x4xbf16>, vector<4x256xbf16>, vector<64x256xf32> -> vector<64x256xf32>
    %96 = arith.addf %92, %95 : vector<64x256xf32>
    %c2_55 = arith.constant 2 : index
    %c0_56 = arith.constant 0 : index
    %c0_57 = arith.constant 0 : index
    %97 = vector.load %arg2[%c2_55, %c0_56, %c0_57] : memref<3x64x4xbf16, #tpu.memory_space<vmem>>, vector<1x64x4xbf16>
    %98 = vector.shape_cast %97 : vector<1x64x4xbf16> to vector<64x4xbf16>
    %cst_58 = arith.constant dense<0.000000e+00> : vector<64x256xf32>
    %99 = tpu.matmul %98, %88, %cst_58 {dimension_numbers = #tpu.dot_dimension_numbers<[1], [0], [0], [1], [0, 0, 1, 1], [], []>} : vector<64x4xbf16>, vector<4x256xbf16>, vector<64x256xf32> -> vector<64x256xf32>
    %100 = arith.addf %96, %99 : vector<64x256xf32>
    %c0_59 = arith.constant 0 : index
    %c0_60 = arith.constant 0 : index
    %101 = vector.load %arg3[%c0_59, %c0_60] : memref<64x1xf32, #tpu.memory_space<vmem>>, vector<64x1xf32>
    %102 = vector.broadcast %101 : vector<64x1xf32> to vector<64x256xf32>
    %103 = arith.addf %100, %102 : vector<64x256xf32>
    %cst_61 = arith.constant 0.000000e+00 : f32
    %104 = vector.broadcast %cst_61 : f32 to vector<64x256xf32>
    %105 = arith.maximumf %103, %104 : vector<64x256xf32>
    %106 = arith.truncf %105 : vector<64x256xf32> to vector<64x256xbf16>
    %c0_62 = arith.constant 0 : index
    %c0_63 = arith.constant 0 : index
    %107 = vector.load %arg4[%c0_62, %c0_63] : memref<3x64xbf16, #tpu.memory_space<vmem>>, vector<3x64xbf16>
    %cst_64 = arith.constant dense<0.000000e+00> : vector<3x256xf32>
    %108 = tpu.matmul %107, %106, %cst_64 {dimension_numbers = #tpu.dot_dimension_numbers<[1], [0], [0], [1], [0, 0, 1, 1], [], []>} : vector<3x64xbf16>, vector<64x256xbf16>, vector<3x256xf32> -> vector<3x256xf32>
    %109 = vector.extract_strided_slice %108 {offsets = [0, 0], sizes = [1, 256], strides = [1, 1]} : vector<3x256xf32> to vector<1x256xf32>
    %110 = tpu.iota {dimensions = array<i32: 1>} : vector<1x256xi32>
    %c0_i32_65 = arith.constant 0 : i32
    %111 = vector.broadcast %c0_i32_65 : i32 to vector<1x256xi32>
    %112 = arith.cmpi eq, %110, %111 : vector<1x256xi32>
    %c1_i32_66 = arith.constant 1 : i32
    %113 = tpu.dynamic_rotate %109 by %c1_i32_66 dim 1 : vector<1x256xf32>, i32 -> vector<1x256xf32>
    %cst_67 = arith.constant 0.000000e+00 : f32
    %114 = vector.broadcast %cst_67 : f32 to vector<1x256xf32>
    %115 = arith.select %112, %114, %113 : vector<1x256xi1>, vector<1x256xf32>
    %116 = vector.extract_strided_slice %108 {offsets = [1, 0], sizes = [1, 256], strides = [1, 1]} : vector<3x256xf32> to vector<1x256xf32>
    %117 = arith.addf %115, %116 : vector<1x256xf32>
    %118 = vector.extract_strided_slice %108 {offsets = [2, 0], sizes = [1, 256], strides = [1, 1]} : vector<3x256xf32> to vector<1x256xf32>
    %119 = tpu.iota {dimensions = array<i32: 1>} : vector<1x256xi32>
    %c255_i32_68 = arith.constant 255 : i32
    %120 = vector.broadcast %c255_i32_68 : i32 to vector<1x256xi32>
    %121 = arith.cmpi eq, %119, %120 : vector<1x256xi32>
    %c255_i32_69 = arith.constant 255 : i32
    %122 = tpu.dynamic_rotate %118 by %c255_i32_69 dim 1 : vector<1x256xf32>, i32 -> vector<1x256xf32>
    %cst_70 = arith.constant 0.000000e+00 : f32
    %123 = vector.broadcast %cst_70 : f32 to vector<1x256xf32>
    %124 = arith.select %121, %123, %122 : vector<1x256xi1>, vector<1x256xf32>
    %125 = arith.addf %117, %124 : vector<1x256xf32>
    %c0_71 = arith.constant 0 : index
    %c0_72 = arith.constant 0 : index
    %126 = vector.load %arg5[%c0_71, %c0_72] : memref<1x1xf32, #tpu.memory_space<vmem>>, vector<1x1xf32>
    %127 = vector.broadcast %126 : vector<1x1xf32> to vector<1x256xf32>
    %128 = arith.addf %125, %127 : vector<1x256xf32>
    %cst_73 = arith.constant 0.000000e+00 : f32
    %129 = vector.broadcast %cst_73 : f32 to vector<1x256xf32>
    %130 = arith.maximumf %128, %129 : vector<1x256xf32>
    %131 = vector.shape_cast %130 : vector<1x256xf32> to vector<1x1x256xf32>
    %cst_74 = arith.constant dense<0.000000e+00> : vector<1xf32>
    %132 = vector.multi_reduction <add>, %131, %cst_74 [1, 2] : vector<1x1x256xf32> to vector<1xf32>
    %133 = vector.shape_cast %132 : vector<1xf32> to vector<1x1x1xf32>
    %134 = vector.extract %133[0, 0, 0] : f32 from vector<1x1x1xf32>
    %135 = arith.addf %63, %134 : f32
    %136 = arith.mulf %130, %130 : vector<1x256xf32>
    %137 = vector.shape_cast %136 : vector<1x256xf32> to vector<1x1x256xf32>
    %cst_75 = arith.constant dense<0.000000e+00> : vector<1xf32>
    %138 = vector.multi_reduction <add>, %137, %cst_75 [1, 2] : vector<1x1x256xf32> to vector<1xf32>
    %139 = vector.shape_cast %138 : vector<1xf32> to vector<1x1x1xf32>
    %140 = vector.extract %139[0, 0, 0] : f32 from vector<1x1x1xf32>
    %141 = arith.addf %69, %140 : f32
    %142 = arith.truncf %130 : vector<1x256xf32> to vector<1x256xbf16>
    %cst_76 = arith.constant dense<0.000000e+00> : vector<1x128xf32>
    %143 = tpu.matmul %142, %0, %cst_76 {dimension_numbers = #tpu.dot_dimension_numbers<[1], [0], [0], [1], [0, 0, 1, 1], [], []>} : vector<1x256xbf16>, vector<256x128xbf16>, vector<1x128xf32> -> vector<1x128xf32>
    %c1_77 = arith.constant 1 : index
    %c0_78 = arith.constant 0 : index
    %144 = vector.load %arg15[%c1_77, %c0_78] : memref<2x128xf32, #tpu.memory_space<vmem>>, vector<1x128xf32>
    tpu.vector_store %arg15[%c1_77, %c0_78], %143 {strides = array<i32>} : memref<2x128xf32, #tpu.memory_space<vmem>>, vector<1x128xf32>,
    %cst_79 = arith.constant 0.001953125 : f32
    %145 = arith.mulf %135, %cst_79 : f32
    %cst_80 = arith.constant 0.001953125 : f32
    %146 = arith.mulf %141, %cst_80 : f32
    %147 = arith.mulf %145, %145 : f32
    %148 = arith.subf %146, %147 : f32
    %cst_81 = arith.constant 9.99999974E-6 : f32
    %149 = arith.addf %148, %cst_81 : f32
    %150 = math.rsqrt %149 : f32
    %c0_82 = arith.constant 0 : index
    %c0_83 = arith.constant 0 : index
    %151 = vector.load %arg6[%c0_82, %c0_83] : memref<1x1xf32, #tpu.memory_space<vmem>>, vector<1x1xf32>
    %152 = vector.broadcast %150 : f32 to vector<1x1xf32>
    %153 = arith.mulf %152, %151 : vector<1x1xf32>
    %c0_84 = arith.constant 0 : index
    %c0_85 = arith.constant 0 : index
    %154 = vector.load %arg7[%c0_84, %c0_85] : memref<1x1xf32, #tpu.memory_space<vmem>>, vector<1x1xf32>
    %155 = vector.broadcast %145 : f32 to vector<1x1xf32>
    %156 = arith.mulf %155, %153 : vector<1x1xf32>
    %157 = arith.subf %154, %156 : vector<1x1xf32>
    %c0_86 = arith.constant 0 : index
    %c0_87 = arith.constant 0 : index
    %158 = vector.load %arg15[%c0_86, %c0_87] : memref<2x128xf32, #tpu.memory_space<vmem>>, vector<2x128xf32>
    %159 = vector.broadcast %153 : vector<1x1xf32> to vector<2x128xf32>
    %160 = arith.mulf %158, %159 : vector<2x128xf32>
    %161 = vector.broadcast %157 : vector<1x1xf32> to vector<2x128xf32>
    %162 = arith.addf %160, %161 : vector<2x128xf32>
    %163 = arith.truncf %162 : vector<2x128xf32> to vector<2x128xbf16>
    %c0_88 = arith.constant 0 : index
    %c0_89 = arith.constant 0 : index
    %164 = vector.load %arg8[%c0_88, %c0_89] : memref<128x512xbf16, #tpu.memory_space<vmem>>, vector<128x512xbf16>
    %cst_90 = arith.constant dense<0.000000e+00> : vector<2x512xf32>
    %165 = tpu.matmul %163, %164, %cst_90 {dimension_numbers = #tpu.dot_dimension_numbers<[1], [0], [0], [1], [0, 0, 1, 1], [], []>} : vector<2x128xbf16>, vector<128x512xbf16>, vector<2x512xf32> -> vector<2x512xf32>
    %c0_91 = arith.constant 0 : index
    %c0_92 = arith.constant 0 : index
    %166 = vector.load %arg9[%c0_91, %c0_92] : memref<1x512xf32, #tpu.memory_space<vmem>>, vector<1x512xf32>
    %167 = vector.broadcast %166 : vector<1x512xf32> to vector<2x512xf32>
    %168 = arith.addf %165, %167 : vector<2x512xf32>
    %cst_93 = arith.constant 0.000000e+00 : f32
    %169 = vector.broadcast %cst_93 : f32 to vector<2x512xf32>
    %170 = arith.maximumf %168, %169 : vector<2x512xf32>
    %171 = arith.truncf %170 : vector<2x512xf32> to vector<2x512xbf16>
    %c0_94 = arith.constant 0 : index
    %c0_95 = arith.constant 0 : index
    %172 = vector.load %arg10[%c0_94, %c0_95] : memref<512x256xbf16, #tpu.memory_space<vmem>>, vector<512x256xbf16>
    %cst_96 = arith.constant dense<0.000000e+00> : vector<2x256xf32>
    %173 = tpu.matmul %171, %172, %cst_96 {dimension_numbers = #tpu.dot_dimension_numbers<[1], [0], [0], [1], [0, 0, 1, 1], [], []>} : vector<2x512xbf16>, vector<512x256xbf16>, vector<2x256xf32> -> vector<2x256xf32>
    %c0_97 = arith.constant 0 : index
    %c0_98 = arith.constant 0 : index
    %174 = vector.load %arg11[%c0_97, %c0_98] : memref<1x256xf32, #tpu.memory_space<vmem>>, vector<1x256xf32>
    %175 = vector.broadcast %174 : vector<1x256xf32> to vector<2x256xf32>
    %176 = arith.addf %173, %175 : vector<2x256xf32>
    %cst_99 = arith.constant 0.000000e+00 : f32
    %177 = vector.broadcast %cst_99 : f32 to vector<2x256xf32>
    %178 = arith.cmpf oge, %176, %177 : vector<2x256xf32>
    %cst_100 = arith.constant 0.00999999977 : f32
    %179 = vector.broadcast %cst_100 : f32 to vector<2x256xf32>
    %180 = arith.mulf %179, %176 : vector<2x256xf32>
    %181 = arith.select %178, %176, %180 : vector<2x256xi1>, vector<2x256xf32>
    %182 = arith.truncf %181 : vector<2x256xf32> to vector<2x256xbf16>
    %c0_101 = arith.constant 0 : index
    %c0_102 = arith.constant 0 : index
    %183 = vector.load %arg12[%c0_101, %c0_102] : memref<256x128xbf16, #tpu.memory_space<vmem>>, vector<256x128xbf16>
    %cst_103 = arith.constant dense<0.000000e+00> : vector<2x128xf32>
    %184 = tpu.matmul %182, %183, %cst_103 {dimension_numbers = #tpu.dot_dimension_numbers<[1], [0], [0], [1], [0, 0, 1, 1], [], []>} : vector<2x256xbf16>, vector<256x128xbf16>, vector<2x128xf32> -> vector<2x128xf32>
    %c0_104 = arith.constant 0 : index
    %c0_105 = arith.constant 0 : index
    %185 = vector.load %arg13[%c0_104, %c0_105] : memref<1x128xf32, #tpu.memory_space<vmem>>, vector<1x128xf32>
    %186 = vector.broadcast %185 : vector<1x128xf32> to vector<2x128xf32>
    %187 = arith.addf %184, %186 : vector<2x128xf32>
    %c0_106 = arith.constant 0 : index
    %c0_107 = arith.constant 0 : index
    %188 = vector.load %arg14[%c0_106, %c0_107] : memref<2x128xf32, #tpu.memory_space<vmem>>, vector<2x128xf32>
    tpu.vector_store %arg14[%c0_106, %c0_107], %187 {strides = array<i32>} : memref<2x128xf32, #tpu.memory_space<vmem>>, vector<2x128xf32>,
    return
  }
}

</mosaic_0001>

<llo_original>
// kernel: language_classifier_forward.1
$region0: #{language_classifier_forward.1}
  #allocation0 [shape = 'u32[]', space=smem, size = 0x4, offset = 0x4, fixed_abs, tag = 'smem constant byte address 0x4 - core index']
  #allocation1 [shape = 'u32[144,128]{1,0:T(1,128)}', space=vmem, size = 0x12000, scoped, tag = 'internal scratch']
  #allocation2 [shape = 'f32[2,128]{1,0:T(2,128)}', space=vmem, size = 0x400, scoped, tag = 'scratch operand']
  #allocation3 [shape = 'f32[1,1]{1,0:T(1,128)S(1)}', space=vmem, size = 0x200, scoped, tag = 'scoped memory for language_classifier_forward.1']
  #allocation4 [shape = 'f32[1,1]{1,0:T(1,128)S(1)}', space=vmem, size = 0x200, scoped, tag = 'scoped memory for language_classifier_forward.1']
  #allocation5 [shape = 'f32[1,1]{1,0:T(1,128)S(1)}', space=vmem, size = 0x200, scoped, tag = 'scoped memory for language_classifier_forward.1']
  %s0 = inlined_call_operand.vmem [shape: f32[2,4,256], index: 0, kind: input, shape index: {}]
  %s1 = inlined_call_operand.vmem [shape: bf16[256,128], index: 1, kind: input, shape index: {}]
  %s2 = inlined_call_operand.vmem [shape: bf16[3,64,4], index: 2, kind: input, shape index: {}]
  %s3 = inlined_call_operand.vmem [shape: f32[64,1], index: 3, kind: input, shape index: {}]
  %s4 = inlined_call_operand.vmem [shape: bf16[3,64], index: 4, kind: input, shape index: {}]
  %s5 = inlined_call_operand.<no memory space> [shape: f32[1,1], index: 5, kind: input, shape index: {}]
  %s6 = inlined_call_operand.<no memory space> [shape: f32[1,1], index: 6, kind: input, shape index: {}]
  %s7 = inlined_call_operand.<no memory space> [shape: f32[1,1], index: 7, kind: input, shape index: {}]
  %s8 = inlined_call_operand.vmem [shape: bf16[128,512], index: 8, kind: input, shape index: {}]
  %s9 = inlined_call_operand.vmem [shape: f32[1,512], index: 9, kind: input, shape index: {}]
  %s10 = inlined_call_operand.hbm [shape: bf16[512,256], index: 10, kind: input, shape index: {}]
  %s11 = inlined_call_operand.vmem [shape: f32[1,256], index: 11, kind: input, shape index: {}]
  %s12 = inlined_call_operand.hbm [shape: bf16[256,128], index: 12, kind: input, shape index: {}]
  %s13 = inlined_call_operand.vmem [shape: f32[1,128], index: 13, kind: input, shape index: {}]
  %s14 = inlined_call_operand.hbm [shape: f32[2,128], index: 14, kind: output, shape index: {}]
  %s15 = sld [smem:[#allocation0]]
  $region74: #{language_classifier_forward.1} parent=0
    _
  %s17 = ssub.s32 1, %s15
  %s18 = scalar_select 0, %s17, %s15
  %v19 = vstv %s5
  %20 = vst [vmem:[#allocation3] sm:$0x1] %v19
  %v21 = vstv %s6
  %22 = vst [vmem:[#allocation4] sm:$0x1] %v21
  %v23 = vstv %s7
  %24 = vst [vmem:[#allocation5] sm:$0x1] %v23
  $region1: #{language_classifier_forward.1} parent=0
    #allocation6 [shape = 'u8[262144]{0}', space=vmem, size = 0x40000, scoped, tag = 'input window, operand 10, single buffered']
    #allocation7 [shape = 's32[1]{0}', space=sflag, size = 0x4, scoped, tag = 'scoped memory for language_classifier_forward.1']
    #allocation8 [shape = 's32[1]{0}', space=sflag, size = 0x4, scoped, tag = 'scoped memory for language_classifier_forward.1']
    #allocation9 [shape = 'u8[65536]{0}', space=vmem, size = 0x10000, scoped, tag = 'input window, operand 12, single buffered']
    #allocation10 [shape = 's32[1]{0}', space=sflag, size = 0x4, scoped, tag = 'scoped memory for language_classifier_forward.1']
    #allocation11 [shape = 'u8[1024]{0}', space=vmem, size = 0x400, scoped, tag = 'output window, operand 0, single buffered']
    %25 = vsyncpa [#allocation7], 0
    %26 = vsyncpa [#allocation10], 0
    %27 = vsyncpa [#allocation8], 0
    // Predicated region
    $region2: #{language_classifier_forward.1} parent=1 // pred_check
      _
    $region3: #{language_classifier_forward.1} parent=1 // pred_check_branch
      %29 = sbr.rel (0) target = $region5
    $region4: #{language_classifier_forward.1} parent=1 // pred_region
      _
    $region5: #{language_classifier_forward.1} parent=1 // pred_fallthru
      _
    // Predicated region
    $region6: #{language_classifier_forward.1} parent=1 // pred_check
      _
    $region7: #{language_classifier_forward.1} parent=1 // pred_check_branch
      %31 = sbr.rel (0) target = $region9
    $region8: #{language_classifier_forward.1} parent=1 // pred_region
      _
    $region9: #{language_classifier_forward.1} parent=1 // pred_fallthru
      _
    // Predicated region
    $region10: #{language_classifier_forward.1} parent=1 // pred_check
      _
    $region11: #{language_classifier_forward.1} parent=1 // pred_check_branch
      %33 = sbr.rel (0) target = $region13
    $region12: #{language_classifier_forward.1} parent=1 // pred_region
      _
    $region13: #{language_classifier_forward.1} parent=1 // pred_fallthru
      _
    // Predicated region
    $region14: #{language_classifier_forward.1} parent=1 // pred_check
      _
    $region15: #{language_classifier_forward.1} parent=1 // pred_check_branch
      %35 = sbr.rel (0) target = $region17
    $region16: #{language_classifier_forward.1} parent=1 // pred_region
      _
    $region17: #{language_classifier_forward.1} parent=1 // pred_fallthru
      _
    // Predicated region
    $region18: #{language_classifier_forward.1} parent=1 // pred_check
      _
    $region19: #{language_classifier_forward.1} parent=1 // pred_check_branch
      %37 = sbr.rel (0) target = $region21
    $region20: #{language_classifier_forward.1} parent=1 // pred_region
      _
    $region21: #{language_classifier_forward.1} parent=1 // pred_fallthru
      _
    // Predicated region
    $region22: #{language_classifier_forward.1} parent=1 // pred_check
      _
    $region23: #{language_classifier_forward.1} parent=1 // pred_check_branch
      %39 = sbr.rel (0) target = $region25
    $region24: #{language_classifier_forward.1} parent=1 // pred_region
      _
    $region25: #{language_classifier_forward.1} parent=1 // pred_fallthru
      _
    // Predicated region
    $region26: #{language_classifier_forward.1} parent=1 // pred_check
      _
    $region27: #{language_classifier_forward.1} parent=1 // pred_check_branch
      %41 = sbr.rel (0) target = $region29
    $region28: #{language_classifier_forward.1} parent=1 // pred_region
      _
    $region29: #{language_classifier_forward.1} parent=1 // pred_fallthru
      _
    // Predicated region
    $region30: #{language_classifier_forward.1} parent=1 // pred_check
      _
    $region31: #{language_classifier_forward.1} parent=1 // pred_check_branch
      %43 = sbr.rel (0) target = $region33
    $region32: #{language_classifier_forward.1} parent=1 // pred_region
      _
    $region33: #{language_classifier_forward.1} parent=1 // pred_fallthru
      _
    // Predicated region
    $region34: #{language_classifier_forward.1} parent=1 // pred_check
      _
    $region35: #{language_classifier_forward.1} parent=1 // pred_check_branch
      %45 = sbr.rel (0) target = $region37
    $region36: #{language_classifier_forward.1} parent=1 // pred_region
      _
    $region37: #{language_classifier_forward.1} parent=1 // pred_fallthru
      _
    // Predicated region
    $region38: #{language_classifier_forward.1} parent=1 // pred_check
      _
    $region39: #{language_classifier_forward.1} parent=1 // pred_check_branch
      %47 = sbr.rel (0) target = $region41
    $region40: #{language_classifier_forward.1} parent=1 // pred_region
      _
    $region41: #{language_classifier_forward.1} parent=1 // pred_fallthru
      _
    // Predicated region
    $region42: #{language_classifier_forward.1} parent=1 // pred_check
      _
    $region43: #{language_classifier_forward.1} parent=1 // pred_check_branch
      %49 = sbr.rel (0) target = $region45
    $region44: #{language_classifier_forward.1} parent=1 // pred_region
      %s51 = ssub.s32 8192, 8192
      %52 = vsyncadd [#allocation7], %s51
      %s53 = sshll.u32 [#allocation6], 4
      %s54 = int_to_ptr.vmem [resolvable:$true] %s53
      %59 = dma.hbm_to_vmem [thread:$0]  %s10, 8192, %s54, [#allocation7], 128, 128, 8
    $region45: #{language_classifier_forward.1} parent=1 // pred_fallthru
      _
    // Predicated region
    $region46: #{language_classifier_forward.1} parent=1 // pred_check
      _
    $region47: #{language_classifier_forward.1} parent=1 // pred_check_branch
      %61 = sbr.rel (0) target = $region49
    $region48: #{language_classifier_forward.1} parent=1 // pred_region
      _
    $region49: #{language_classifier_forward.1} parent=1 // pred_fallthru
      _
    // Predicated region
    $region50: #{language_classifier_forward.1} parent=1 // pred_check
      _
    $region51: #{language_classifier_forward.1} parent=1 // pred_check_branch
      %63 = sbr.rel (0) target = $region53
    $region52: #{language_classifier_forward.1} parent=1 // pred_region
      %s65 = ssub.s32 2048, 2048
      %66 = vsyncadd [#allocation10], %s65
      %s67 = sshll.u32 [#allocation9], 4
      %s68 = int_to_ptr.vmem [resolvable:$true] %s67
      %73 = dma.hbm_to_vmem [thread:$0]  %s12, 2048, %s68, [#allocation10], 64, 64, 4
    $region53: #{language_classifier_forward.1} parent=1 // pred_fallthru
      _
    // Predicated region
    $region54: #{language_classifier_forward.1} parent=1 // pred_check
      _
    $region55: #{language_classifier_forward.1} parent=1 // pred_check_branch
      %75 = sbr.rel (0) target = $region57
    $region56: #{language_classifier_forward.1} parent=1 // pred_region
      _
    $region57: #{language_classifier_forward.1} parent=1 // pred_fallthru
      _
    // Predicated region
    $region58: #{language_classifier_forward.1} parent=1 // pred_check
      _
    $region59: #{language_classifier_forward.1} parent=1 // pred_check_branch
      %77 = sbr.rel (0) target = $region61
    $region60: #{language_classifier_forward.1} parent=1 // pred_region
      %78 = dma.done [#allocation7], 8192
    $region61: #{language_classifier_forward.1} parent=1 // pred_fallthru
      _
    // Predicated region
    $region62: #{language_classifier_forward.1} parent=1 // pred_check
      _
    $region63: #{language_classifier_forward.1} parent=1 // pred_check_branch
      %80 = sbr.rel (0) target = $region65
    $region64: #{language_classifier_forward.1} parent=1 // pred_region
      %81 = dma.done [#allocation10], 2048
    $region65: #{language_classifier_forward.1} parent=1 // pred_fallthru
      _
    %v83 = vld [vmem:[%s1] sm:$0xf]
    %v84 = vld [vmem:[%s1 + $0x4] sm:$0xf]
    %v85 = vld [vmem:[%s1 + $0x8] sm:$0xf]
    %v86 = vld [vmem:[%s1 + $0xc] sm:$0xf]
    %v87 = vld [vmem:[%s1 + $0x10] sm:$0xf]
    %v88 = vld [vmem:[%s1 + $0x14] sm:$0xf]
    %v89 = vld [vmem:[%s1 + $0x18] sm:$0xf]
    %v90 = vld [vmem:[%s1 + $0x1c] sm:$0xf]
    %v91 = vld [vmem:[%s1 + $0x20] sm:$0xf]
    %v92 = vld [vmem:[%s1 + $0x24] sm:$0xf]
    %v93 = vld [vmem:[%s1 + $0x28] sm:$0xf]
    %v94 = vld [vmem:[%s1 + $0x2c] sm:$0xf]
    %v95 = vld [vmem:[%s1 + $0x30] sm:$0xf]
    %v96 = vld [vmem:[%s1 + $0x34] sm:$0xf]
    %v97 = vld [vmem:[%s1 + $0x38] sm:$0xf]
    %v98 = vld [vmem:[%s1 + $0x3c] sm:$0xf]
    %v99 = vld [vmem:[%s1 + $0x40] sm:$0xf]
    %v100 = vld [vmem:[%s1 + $0x44] sm:$0xf]
    %v101 = vld [vmem:[%s1 + $0x48] sm:$0xf]
    %v102 = vld [vmem:[%s1 + $0x4c] sm:$0xf]
    %v103 = vld [vmem:[%s1 + $0x50] sm:$0xf]
    %v104 = vld [vmem:[%s1 + $0x54] sm:$0xf]
    %v105 = vld [vmem:[%s1 + $0x58] sm:$0xf]
    %v106 = vld [vmem:[%s1 + $0x5c] sm:$0xf]
    %v107 = vld [vmem:[%s1 + $0x60] sm:$0xf]
    %v108 = vld [vmem:[%s1 + $0x64] sm:$0xf]
    %v109 = vld [vmem:[%s1 + $0x68] sm:$0xf]
    %v110 = vld [vmem:[%s1 + $0x6c] sm:$0xf]
    %v111 = vld [vmem:[%s1 + $0x70] sm:$0xf]
    %v112 = vld [vmem:[%s1 + $0x74] sm:$0xf]
    %v113 = vld [vmem:[%s1 + $0x78] sm:$0xf]
    %v114 = vld [vmem:[%s1 + $0x7c] sm:$0xf]
    %v115 = vld [vmem:[%s0] sm:$0xff]
    %v116 = vlaneseq
    %v117 = vand.u32 %v116, 127
    %v118 = vadd.s32 %v117, 128
    %vm119 = vcmp.eq.s32.totalorder %v117, 0
    %vm120 = vcmp.eq.s32.totalorder %v118, 0
    %v122 = vcombine.high %v115, %v115
    %124 = vrot.lane.b32.xlu0 %v115, 1
    %v125 = vpop.permute.xlu0 %124
    %126 = vrot.lane.b32.xlu0 %v122, 1
    %v127 = vpop.permute.xlu0 %126
    %vm128 = vcmp.lt.s32.totalorder %v117, 1
    %v129 = vsel %vm128, %v125, %v127
    %v130 = vsel %vm128, %v127, %v125
    %v131 = vsel %vm119, 0.0, %v130
    %v132 = vsel %vm120, 0.0, %v129
    %v133 = vpack.c.bf16 %v131, %v131
    %v134 = vpack.c.bf16 %v132, %v132
    %vm135 = vcmp.eq.s32.totalorder %v117, 255
    %vm136 = vcmp.eq.s32.totalorder %v118, 255
    %137 = vrot.lane.b32.xlu0 %v115, 127
    %v138 = vpop.permute.xlu0 %137
    %139 = vrot.lane.b32.xlu0 %v122, 127
    %v140 = vpop.permute.xlu0 %139
    %vm141 = vcmp.lt.s32.totalorder %v117, 127
    %v142 = vsel %vm141, %v138, %v140
    %v143 = vsel %vm141, %v140, %v138
    %v144 = vsel %vm135, 0.0, %v142
    %v145 = vsel %vm136, 0.0, %v143
    %v146 = vpack.c.bf16 %v144, %v144
    %v147 = vpack.c.bf16 %v145, %v145
    %v148 = vpack.c.bf16 %v115, %v115
    %v149 = vpack.c.bf16 %v122, %v122
    %v150 = vld [vmem:[%s2] sm:$0xf]
    %v151 = vld [vmem:[%s2 + $0x4] sm:$0xf]
    %v152 = vld [vmem:[%s2 + $0x8] sm:$0xf]
    %v153 = vld [vmem:[%s2 + $0xc] sm:$0xf]
    %v154 = vld [vmem:[%s2 + $0x10] sm:$0xf]
    %v155 = vld [vmem:[%s2 + $0x14] sm:$0xf]
    %v156 = vld [vmem:[%s2 + $0x18] sm:$0xf]
    %v157 = vld [vmem:[%s2 + $0x1c] sm:$0xf]
    %s158 = scalar_lea.vmem %s2, 32
    %v159 = vld [vmem:[%s158] sm:$0xf]
    %v160 = vld [vmem:[%s158 + $0x4] sm:$0xf]
    %v161 = vld [vmem:[%s158 + $0x8] sm:$0xf]
    %v162 = vld [vmem:[%s158 + $0xc] sm:$0xf]
    %v163 = vld [vmem:[%s158 + $0x10] sm:$0xf]
    %v164 = vld [vmem:[%s158 + $0x14] sm:$0xf]
    %v165 = vld [vmem:[%s158 + $0x18] sm:$0xf]
    %v166 = vld [vmem:[%s158 + $0x1c] sm:$0xf]
    %v175 = vunpack.c.l.b16 %v159
    %v176 = vunpack.c.l.b16 %v160
    %v177 = vunpack.c.l.b16 %v161
    %v178 = vunpack.c.l.b16 %v162
    %v179 = vunpack.c.l.b16 %v163
    %v180 = vunpack.c.l.b16 %v164
    %v181 = vunpack.c.l.b16 %v165
    %v182 = vunpack.c.l.b16 %v166
    %v183 = vpack.c.b16 %v176, %v175
    %v184 = vpack.c.b16 %v178, %v177
    %v185 = vpack.c.b16 %v180, %v179
    %v186 = vpack.c.b16 %v182, %v181
    %vm187 = vcmask 31744
    %v189 = vsel %vm187, %v183, 0
    %v192 = vsel %vm187, %v184, 0
    %v195 = vsel %vm187, %v185, 0
    %v198 = vsel %vm187, %v186, 0
    %vm200 = vcmask 1041408
    %v202 = vsel %vm200, %v148, 0
    %v205 = vsel %vm200, %v149, 0
    %207 = vmatprep.subr.bf16.mxu0 %v205
    %208 = vmatpush1.bf16.msra.mxu0 %v202
    %209 = vmatprep.subr.bf16.mxu0 0
    %210 = vmatpush1.bf16.msra.mxu0 0
    %211 = vmatprep.subr.bf16.mxu0 0
    %212 = vmatpush1.bf16.msra.mxu0 0
    %213 = vmatprep.subr.bf16.mxu0 0
    %214 = vmatpush1.bf16.msra.mxu0 0
    %215 = vmatprep.subr.bf16.mxu0 0
    %216 = vmatpush1.bf16.msra.mxu0 0
    %217 = vmatprep.subr.bf16.mxu0 0
    %218 = vmatpush1.bf16.msra.mxu0 0
    %219 = vmatprep.subr.bf16.mxu0 0
    %220 = vmatpush1.bf16.msra.mxu0 0
    %221 = vmatprep.subr.bf16.mxu0 0
    %222 = vmatpush1.bf16.msra.mxu0 0
    %223 = vmatprep.subr.bf16.mxu0 0
    %224 = vmatpush1.bf16.msra.mxu0 0
    %225 = vmatprep.subr.bf16.mxu0 0
    %226 = vmatpush1.bf16.msra.mxu0 0
    %227 = vmatprep.subr.bf16.mxu0 0
    %228 = vmatpush1.bf16.msra.mxu0 0
    %229 = vmatprep.subr.bf16.mxu0 0
    %230 = vmatpush1.bf16.msra.mxu0 0
    %231 = vmatprep.subr.bf16.mxu0 0
    %232 = vmatpush1.bf16.msra.mxu0 0
    %233 = vmatprep.subr.bf16.mxu0 0
    %234 = vmatpush1.bf16.msra.mxu0 0
    %235 = vmatprep.subr.bf16.mxu0 0
    %236 = vmatpush1.bf16.msra.mxu0 0
    %237 = vmatprep.subr.bf16.mxu0 0
    %238 = vmatpush1.bf16.msra.mxu0 0
    %239 = vmatprep.mubr.bf16.mxu0 0
    %240 = vmatmul.mubr.bf16.gmra.mrb[0].mxu0 %v189
    %v241 = vpop.f32.mrb[0].mxu0
    %v242 = vadd.f32 0.0, %v241
    %v243 = vpop.f32.mrb[0].mxu0
    %v244 = vadd.f32 0.0, %v243
    %v245 = vpop.f32.mrb[0].mxu0
    %v246 = vadd.f32 0.0, %v245
    %v247 = vpop.f32.mrb[0].mxu0
    %v248 = vadd.f32 0.0, %v247
    %249 = vmatprep.mubr.bf16.mxu0 0
    %250 = vmatmul.mubr.bf16.gmra.mrb[0].mxu0 %v192
    %v251 = vpop.f32.mrb[0].mxu0
    %v252 = vadd.f32 0.0, %v251
    %v253 = vpop.f32.mrb[0].mxu0
    %v254 = vadd.f32 0.0, %v253
    %v255 = vpop.f32.mrb[0].mxu0
    %v256 = vadd.f32 0.0, %v255
    %v257 = vpop.f32.mrb[0].mxu0
    %v258 = vadd.f32 0.0, %v257
    %259 = vmatprep.mubr.bf16.mxu0 0
    %260 = vmatmul.mubr.bf16.gmra.mrb[0].mxu0 %v195
    %v261 = vpop.f32.mrb[0].mxu0
    %v262 = vadd.f32 0.0, %v261
    %v263 = vpop.f32.mrb[0].mxu0
    %v264 = vadd.f32 0.0, %v263
    %v265 = vpop.f32.mrb[0].mxu0
    %v266 = vadd.f32 0.0, %v265
    %v267 = vpop.f32.mrb[0].mxu0
    %v268 = vadd.f32 0.0, %v267
    %269 = vmatprep.mubr.bf16.mxu0 0
    %270 = vmatmul.mubr.bf16.gmra.mrb[0].mxu0 %v198
    %v271 = vpop.f32.mrb[0].mxu0
    %v272 = vadd.f32 0.0, %v271
    %v273 = vpop.f32.mrb[0].mxu0
    %v274 = vadd.f32 0.0, %v273
    %v275 = vpop.f32.mrb[0].mxu0
    %v276 = vadd.f32 0.0, %v275
    %v277 = vpop.f32.mrb[0].mxu0
    %v278 = vadd.f32 0.0, %v277
    %279 = vdwg.mxu0
    %v288 = vunpack.c.l.b16 %v150
    %v289 = vunpack.c.l.b16 %v151
    %v290 = vunpack.c.l.b16 %v152
    %v291 = vunpack.c.l.b16 %v153
    %v292 = vunpack.c.l.b16 %v154
    %v293 = vunpack.c.l.b16 %v155
    %v294 = vunpack.c.l.b16 %v156
    %v295 = vunpack.c.l.b16 %v157
    %v296 = vpack.c.b16 %v289, %v288
    %v297 = vpack.c.b16 %v291, %v290
    %v298 = vpack.c.b16 %v293, %v292
    %v299 = vpack.c.b16 %v295, %v294
    %v301 = vsel %vm187, %v296, 0
    %v304 = vsel %vm187, %v297, 0
    %v307 = vsel %vm187, %v298, 0
    %v310 = vsel %vm187, %v299, 0
    %v313 = vsel %vm200, %v133, 0
    %v316 = vsel %vm200, %v134, 0
    %318 = vmatprep.subr.bf16.mxu0 %v316
    %319 = vmatpush1.bf16.msra.mxu0 %v313
    %320 = vmatprep.subr.bf16.mxu0 0
    %321 = vmatpush1.bf16.msra.mxu0 0
    %322 = vmatprep.subr.bf16.mxu0 0
    %323 = vmatpush1.bf16.msra.mxu0 0
    %324 = vmatprep.subr.bf16.mxu0 0
    %325 = vmatpush1.bf16.msra.mxu0 0
    %326 = vmatprep.subr.bf16.mxu0 0
    %327 = vmatpush1.bf16.msra.mxu0 0
    %328 = vmatprep.subr.bf16.mxu0 0
    %329 = vmatpush1.bf16.msra.mxu0 0
    %330 = vmatprep.subr.bf16.mxu0 0
    %331 = vmatpush1.bf16.msra.mxu0 0
    %332 = vmatprep.subr.bf16.mxu0 0
    %333 = vmatpush1.bf16.msra.mxu0 0
    %334 = vmatprep.subr.bf16.mxu0 0
    %335 = vmatpush1.bf16.msra.mxu0 0
    %336 = vmatprep.subr.bf16.mxu0 0
    %337 = vmatpush1.bf16.msra.mxu0 0
    %338 = vmatprep.subr.bf16.mxu0 0
    %339 = vmatpush1.bf16.msra.mxu0 0
    %340 = vmatprep.subr.bf16.mxu0 0
    %341 = vmatpush1.bf16.msra.mxu0 0
    %342 = vmatprep.subr.bf16.mxu0 0
    %343 = vmatpush1.bf16.msra.mxu0 0
    %344 = vmatprep.subr.bf16.mxu0 0
    %345 = vmatpush1.bf16.msra.mxu0 0
    %346 = vmatprep.subr.bf16.mxu0 0
    %347 = vmatpush1.bf16.msra.mxu0 0
    %348 = vmatprep.subr.bf16.mxu0 0
    %349 = vmatpush1.bf16.msra.mxu0 0
    %350 = vmatprep.mubr.bf16.mxu0 0
    %351 = vmatmul.mubr.bf16.gmra.mrb[0].mxu0 %v301
    %v352 = vpop.f32.mrb[0].mxu0
    %v353 = vadd.f32 %v242, %v352
    %v354 = vpop.f32.mrb[0].mxu0
    %v355 = vadd.f32 %v244, %v354
    %v356 = vpop.f32.mrb[0].mxu0
    %v357 = vadd.f32 %v246, %v356
    %v358 = vpop.f32.mrb[0].mxu0
    %v359 = vadd.f32 %v248, %v358
    %360 = vmatprep.mubr.bf16.mxu0 0
    %361 = vmatmul.mubr.bf16.gmra.mrb[0].mxu0 %v304
    %v362 = vpop.f32.mrb[0].mxu0
    %v363 = vadd.f32 %v252, %v362
    %v364 = vpop.f32.mrb[0].mxu0
    %v365 = vadd.f32 %v254, %v364
    %v366 = vpop.f32.mrb[0].mxu0
    %v367 = vadd.f32 %v256, %v366
    %v368 = vpop.f32.mrb[0].mxu0
    %v369 = vadd.f32 %v258, %v368
    %370 = vmatprep.mubr.bf16.mxu0 0
    %371 = vmatmul.mubr.bf16.gmra.mrb[0].mxu0 %v307
    %v372 = vpop.f32.mrb[0].mxu0
    %v373 = vadd.f32 %v262, %v372
    %v374 = vpop.f32.mrb[0].mxu0
    %v375 = vadd.f32 %v264, %v374
    %v376 = vpop.f32.mrb[0].mxu0
    %v377 = vadd.f32 %v266, %v376
    %v378 = vpop.f32.mrb[0].mxu0
    %v379 = vadd.f32 %v268, %v378
    %380 = vmatprep.mubr.bf16.mxu0 0
    %381 = vmatmul.mubr.bf16.gmra.mrb[0].mxu0 %v310
    %v382 = vpop.f32.mrb[0].mxu0
    %v383 = vadd.f32 %v272, %v382
    %v384 = vpop.f32.mrb[0].mxu0
    %v385 = vadd.f32 %v274, %v384
    %v386 = vpop.f32.mrb[0].mxu0
    %v387 = vadd.f32 %v276, %v386
    %v388 = vpop.f32.mrb[0].mxu0
    %v389 = vadd.f32 %v278, %v388
    %390 = vdwg.mxu0
    %s391 = scalar_lea.vmem %s2, 64
    %v392 = vld [vmem:[%s391] sm:$0xf]
    %v393 = vld [vmem:[%s391 + $0x4] sm:$0xf]
    %v394 = vld [vmem:[%s391 + $0x8] sm:$0xf]
    %v395 = vld [vmem:[%s391 + $0xc] sm:$0xf]
    %v396 = vld [vmem:[%s391 + $0x10] sm:$0xf]
    %v397 = vld [vmem:[%s391 + $0x14] sm:$0xf]
    %v398 = vld [vmem:[%s391 + $0x18] sm:$0xf]
    %v399 = vld [vmem:[%s391 + $0x1c] sm:$0xf]
    %v408 = vunpack.c.l.b16 %v392
    %v409 = vunpack.c.l.b16 %v393
    %v410 = vunpack.c.l.b16 %v394
    %v411 = vunpack.c.l.b16 %v395
    %v412 = vunpack.c.l.b16 %v396
    %v413 = vunpack.c.l.b16 %v397
    %v414 = vunpack.c.l.b16 %v398
    %v415 = vunpack.c.l.b16 %v399
    %v416 = vpack.c.b16 %v409, %v408
    %v417 = vpack.c.b16 %v411, %v410
    %v418 = vpack.c.b16 %v413, %v412
    %v419 = vpack.c.b16 %v415, %v414
    %v421 = vsel %vm187, %v416, 0
    %v424 = vsel %vm187, %v417, 0
    %v427 = vsel %vm187, %v418, 0
    %v430 = vsel %vm187, %v419, 0
    %v433 = vsel %vm200, %v146, 0
    %v436 = vsel %vm200, %v147, 0
    %438 = vmatprep.subr.bf16.mxu0 %v436
    %439 = vmatpush1.bf16.msra.mxu0 %v433
    %440 = vmatprep.subr.bf16.mxu0 0
    %441 = vmatpush1.bf16.msra.mxu0 0
    %442 = vmatprep.subr.bf16.mxu0 0
    %443 = vmatpush1.bf16.msra.mxu0 0
    %444 = vmatprep.subr.bf16.mxu0 0
    %445 = vmatpush1.bf16.msra.mxu0 0
    %446 = vmatprep.subr.bf16.mxu0 0
    %447 = vmatpush1.bf16.msra.mxu0 0
    %448 = vmatprep.subr.bf16.mxu0 0
    %449 = vmatpush1.bf16.msra.mxu0 0
    %450 = vmatprep.subr.bf16.mxu0 0
    %451 = vmatpush1.bf16.msra.mxu0 0
    %452 = vmatprep.subr.bf16.mxu0 0
    %453 = vmatpush1.bf16.msra.mxu0 0
    %454 = vmatprep.subr.bf16.mxu0 0
    %455 = vmatpush1.bf16.msra.mxu0 0
    %456 = vmatprep.subr.bf16.mxu0 0
    %457 = vmatpush1.bf16.msra.mxu0 0
    %458 = vmatprep.subr.bf16.mxu0 0
    %459 = vmatpush1.bf16.msra.mxu0 0
    %460 = vmatprep.subr.bf16.mxu0 0
    %461 = vmatpush1.bf16.msra.mxu0 0
    %462 = vmatprep.subr.bf16.mxu0 0
    %463 = vmatpush1.bf16.msra.mxu0 0
    %464 = vmatprep.subr.bf16.mxu0 0
    %465 = vmatpush1.bf16.msra.mxu0 0
    %466 = vmatprep.subr.bf16.mxu0 0
    %467 = vmatpush1.bf16.msra.mxu0 0
    %468 = vmatprep.subr.bf16.mxu0 0
    %469 = vmatpush1.bf16.msra.mxu0 0
    %470 = vmatprep.mubr.bf16.mxu0 0
    %471 = vmatmul.mubr.bf16.gmra.mrb[0].mxu0 %v421
    %v472 = vpop.f32.mrb[0].mxu0
    %v473 = vadd.f32 0.0, %v472
    %v474 = vpop.f32.mrb[0].mxu0
    %v475 = vadd.f32 0.0, %v474
    %v476 = vpop.f32.mrb[0].mxu0
    %v477 = vadd.f32 0.0, %v476
    %v478 = vpop.f32.mrb[0].mxu0
    %v479 = vadd.f32 0.0, %v478
    %480 = vmatprep.mubr.bf16.mxu0 0
    %481 = vmatmul.mubr.bf16.gmra.mrb[0].mxu0 %v424
    %v482 = vpop.f32.mrb[0].mxu0
    %v483 = vadd.f32 0.0, %v482
    %v484 = vpop.f32.mrb[0].mxu0
    %v485 = vadd.f32 0.0, %v484
    %v486 = vpop.f32.mrb[0].mxu0
    %v487 = vadd.f32 0.0, %v486
    %v488 = vpop.f32.mrb[0].mxu0
    %v489 = vadd.f32 0.0, %v488
    %490 = vmatprep.mubr.bf16.mxu0 0
    %491 = vmatmul.mubr.bf16.gmra.mrb[0].mxu0 %v427
    %v492 = vpop.f32.mrb[0].mxu0
    %v493 = vadd.f32 0.0, %v492
    %v494 = vpop.f32.mrb[0].mxu0
    %v495 = vadd.f32 0.0, %v494
    %v496 = vpop.f32.mrb[0].mxu0
    %v497 = vadd.f32 0.0, %v496
    %v498 = vpop.f32.mrb[0].mxu0
    %v499 = vadd.f32 0.0, %v498
    %500 = vmatprep.mubr.bf16.mxu0 0
    %501 = vmatmul.mubr.bf16.gmra.mrb[0].mxu0 %v430
    %v502 = vpop.f32.mrb[0].mxu0
    %v503 = vadd.f32 0.0, %v502
    %v504 = vpop.f32.mrb[0].mxu0
    %v505 = vadd.f32 0.0, %v504
    %v506 = vpop.f32.mrb[0].mxu0
    %v507 = vadd.f32 0.0, %v506
    %v508 = vpop.f32.mrb[0].mxu0
    %v509 = vadd.f32 0.0, %v508
    %510 = vdwg.mxu0
    %v511 = vadd.f32 %v353, %v473
    %v512 = vadd.f32 %v355, %v475
    %v513 = vadd.f32 %v357, %v477
    %v514 = vadd.f32 %v359, %v479
    %v515 = vadd.f32 %v363, %v483
    %v516 = vadd.f32 %v365, %v485
    %v517 = vadd.f32 %v367, %v487
    %v518 = vadd.f32 %v369, %v489
    %v519 = vadd.f32 %v373, %v493
    %v520 = vadd.f32 %v375, %v495
    %v521 = vadd.f32 %v377, %v497
    %v522 = vadd.f32 %v379, %v499
    %v523 = vadd.f32 %v383, %v503
    %v524 = vadd.f32 %v385, %v505
    %v525 = vadd.f32 %v387, %v507
    %v526 = vadd.f32 %v389, %v509
    %v527 = vld [vmem:[%s3] sm:$0xff]
    %v528 = vld [vmem:[%s3 + $0x8] sm:$0xff]
    %v529 = vld [vmem:[%s3 + $0x10] sm:$0xff]
    %v530 = vld [vmem:[%s3 + $0x18] sm:$0xff]
    %v531 = vld [vmem:[%s3 + $0x20] sm:$0xff]
    %v532 = vld [vmem:[%s3 + $0x28] sm:$0xff]
    %v533 = vld [vmem:[%s3 + $0x30] sm:$0xff]
    %v534 = vld [vmem:[%s3 + $0x38] sm:$0xff]
    %536 = vset.pattern.permute.xlu0 0
    %537 = vperm.xlu0 %536, %v527
    %v538 = vpop.permute.xlu0 %537
    %541 = vset.pattern.permute.xlu0 0
    %542 = vperm.xlu0 %541, %v528
    %v543 = vpop.permute.xlu0 %542
    %546 = vset.pattern.permute.xlu0 0
    %547 = vperm.xlu0 %546, %v529
    %v548 = vpop.permute.xlu0 %547
    %551 = vset.pattern.permute.xlu0 0
    %552 = vperm.xlu0 %551, %v530
    %v553 = vpop.permute.xlu0 %552
    %556 = vset.pattern.permute.xlu0 0
    %557 = vperm.xlu0 %556, %v531
    %v558 = vpop.permute.xlu0 %557
    %561 = vset.pattern.permute.xlu0 0
    %562 = vperm.xlu0 %561, %v532
    %v563 = vpop.permute.xlu0 %562
    %566 = vset.pattern.permute.xlu0 0
    %567 = vperm.xlu0 %566, %v533
    %v568 = vpop.permute.xlu0 %567
    %571 = vset.pattern.permute.xlu0 0
    %572 = vperm.xlu0 %571, %v534
    %v573 = vpop.permute.xlu0 %572
    %v575 = vadd.f32 %v511, %v538
    %v576 = vadd.f32 %v512, %v538
    %v577 = vadd.f32 %v513, %v543
    %v578 = vadd.f32 %v514, %v543
    %v579 = vadd.f32 %v515, %v548
    %v580 = vadd.f32 %v516, %v548
    %v581 = vadd.f32 %v517, %v553
    %v582 = vadd.f32 %v518, %v553
    %v583 = vadd.f32 %v519, %v558
    %v584 = vadd.f32 %v520, %v558
    %v585 = vadd.f32 %v521, %v563
    %v586 = vadd.f32 %v522, %v563
    %v587 = vadd.f32 %v523, %v568
    %v588 = vadd.f32 %v524, %v568
    %v589 = vadd.f32 %v525, %v573
    %v590 = vadd.f32 %v526, %v573
    %v591 = vmax.f32 %v575, 0.0
    %v592 = vmax.f32 %v576, 0.0
    %v593 = vmax.f32 %v577, 0.0
    %v594 = vmax.f32 %v578, 0.0
    %v595 = vmax.f32 %v579, 0.0
    %v596 = vmax.f32 %v580, 0.0
    %v597 = vmax.f32 %v581, 0.0
    %v598 = vmax.f32 %v582, 0.0
    %v599 = vmax.f32 %v583, 0.0
    %v600 = vmax.f32 %v584, 0.0
    %v601 = vmax.f32 %v585, 0.0
    %v602 = vmax.f32 %v586, 0.0
    %v603 = vmax.f32 %v587, 0.0
    %v604 = vmax.f32 %v588, 0.0
    %v605 = vmax.f32 %v589, 0.0
    %v606 = vmax.f32 %v590, 0.0
    %v607 = vpack.c.bf16 %v593, %v591
    %v608 = vpack.c.bf16 %v594, %v592
    %v609 = vpack.c.bf16 %v597, %v595
    %v610 = vpack.c.bf16 %v598, %v596
    %v611 = vpack.c.bf16 %v601, %v599
    %v612 = vpack.c.bf16 %v602, %v600
    %v613 = vpack.c.bf16 %v605, %v603
    %v614 = vpack.c.bf16 %v606, %v604
    %v615 = vld [vmem:[%s4] sm:$0x3]
    %vm616 = vcmask 523264
    %v618 = vsel %vm616, %v615, 0
    %620 = vmatprep.subr.bf16.mxu0 %v608
    %621 = vmatpush1.bf16.msra.mxu0 %v607
    %622 = vmatprep.subr.bf16.mxu0 %v610
    %623 = vmatpush1.bf16.msra.mxu0 %v609
    %624 = vmatprep.subr.bf16.mxu0 %v612
    %625 = vmatpush1.bf16.msra.mxu0 %v611
    %626 = vmatprep.subr.bf16.mxu0 %v614
    %627 = vmatpush1.bf16.msra.mxu0 %v613
    %628 = vmatprep.subr.bf16.mxu0 0
    %629 = vmatpush1.bf16.msra.mxu0 0
    %630 = vmatprep.subr.bf16.mxu0 0
    %631 = vmatpush1.bf16.msra.mxu0 0
    %632 = vmatprep.subr.bf16.mxu0 0
    %633 = vmatpush1.bf16.msra.mxu0 0
    %634 = vmatprep.subr.bf16.mxu0 0
    %635 = vmatpush1.bf16.msra.mxu0 0
    %636 = vmatprep.subr.bf16.mxu0 0
    %637 = vmatpush1.bf16.msra.mxu0 0
    %638 = vmatprep.subr.bf16.mxu0 0
    %639 = vmatpush1.bf16.msra.mxu0 0
    %640 = vmatprep.subr.bf16.mxu0 0
    %641 = vmatpush1.bf16.msra.mxu0 0
    %642 = vmatprep.subr.bf16.mxu0 0
    %643 = vmatpush1.bf16.msra.mxu0 0
    %644 = vmatprep.subr.bf16.mxu0 0
    %645 = vmatpush1.bf16.msra.mxu0 0
    %646 = vmatprep.subr.bf16.mxu0 0
    %647 = vmatpush1.bf16.msra.mxu0 0
    %648 = vmatprep.subr.bf16.mxu0 0
    %649 = vmatpush1.bf16.msra.mxu0 0
    %650 = vmatprep.subr.bf16.mxu0 0
    %651 = vmatpush1.bf16.msra.mxu0 0
    %652 = vmatprep.mubr.bf16.mxu0 0
    %653 = vmatmul.mubr.bf16.gmra.mrb[0].mxu0 %v618
    %v654 = vpop.f32.mrb[0].mxu0
    %v655 = vadd.f32 0.0, %v654
    %v656 = vpop.f32.mrb[0].mxu0
    %v657 = vadd.f32 0.0, %v656
    %v658 = vpop.f32.mrb[0].mxu0
    %v659 = vpop.f32.mrb[0].mxu0
    %660 = vdwg.mxu0
    %661 = vrot.lane.b32.xlu0 %v655, 1
    %v662 = vpop.permute.xlu0 %661
    %663 = vrot.lane.b32.xlu0 %v657, 1
    %v664 = vpop.permute.xlu0 %663
    %v665 = vsel %vm128, %v662, %v664
    %v666 = vsel %vm128, %v664, %v662
    %v667 = vsel %vm119, 0.0, %v666
    %v668 = vsel %vm120, 0.0, %v665
    %v671 = vrot.slane %v655, 1
    %v672 = vrot.slane %v657, 1
    %v675 = vadd.f32 %v667, %v671
    %v676 = vadd.f32 %v668, %v672
    %v677 = vrot.slane %v655, 2
    %v678 = vrot.slane %v657, 2
    %681 = vrot.lane.b32.xlu0 %v677, 127
    %v682 = vpop.permute.xlu0 %681
    %683 = vrot.lane.b32.xlu0 %v678, 127
    %v684 = vpop.permute.xlu0 %683
    %v685 = vsel %vm141, %v682, %v684
    %v686 = vsel %vm141, %v684, %v682
    %v687 = vsel %vm135, 0.0, %v685
    %v688 = vsel %vm136, 0.0, %v686
    %v689 = vadd.f32 %v675, %v687
    %v690 = vadd.f32 %v676, %v688
    %v691 = vld [vmem:[#allocation3] sm:$0x1]
    %693 = vset.pattern.permute.xlu0 0
    %694 = vperm.xlu0 %693, %v691
    %v695 = vpop.permute.xlu0 %694
    %v697 = vlaneseq
    %v698 = vshrl.u32 %v697, 7
    %v699 = vsub.s32 0, %v698
    %v700 = vrot.slane %v695, %v699
    %v701 = vadd.f32 %v689, %v700
    %v702 = vadd.f32 %v690, %v700
    %v703 = vmax.f32 %v701, 0.0
    %v704 = vmax.f32 %v702, 0.0
    %vm705 = vcmask 1040384
    %v706 = vsel %vm705, %v703, 0.0
    %v707 = vsel %vm705, %v704, 0.0
    %v708 = vadd.f32 %v706, %v707
    %709 = vadd.xlane.f32.xlu0 %v708
    %v710 = vpop.xlane.xlu0 %709
    %v711 = vrot.slane %v710, 4
    %v712 = vadd.f32 %v710, %v711
    %v713 = vrot.slane %v712, 2
    %v714 = vadd.f32 %v712, %v713
    %v715 = vrot.slane %v714, 1
    %v716 = vadd.f32 %v714, %v715
    %s717 = vtos %v716
    %s718 = sadd.f32 %s717, 0.0
    %v719 = vmul.f32 %v703, %v703
    %v720 = vmul.f32 %v704, %v704
    %v721 = vsel %vm705, %v719, 0.0
    %v722 = vsel %vm705, %v720, 0.0
    %v723 = vadd.f32 %v721, %v722
    %724 = vadd.xlane.f32.xlu0 %v723
    %v725 = vpop.xlane.xlu0 %724
    %v726 = vrot.slane %v725, 4
    %v727 = vadd.f32 %v725, %v726
    %v728 = vrot.slane %v727, 2
    %v729 = vadd.f32 %v727, %v728
    %v730 = vrot.slane %v729, 1
    %v731 = vadd.f32 %v729, %v730
    %s732 = vtos %v731
    %s733 = sadd.f32 %s732, 0.0
    %v734 = vpack.c.bf16 %v703, %v703
    %v735 = vpack.c.bf16 %v704, %v704
    %v768 = vunpack.c.l.b16 %v83
    %v769 = vunpack.c.l.b16 %v84
    %v770 = vunpack.c.l.b16 %v85
    %v771 = vunpack.c.l.b16 %v86
    %v772 = vunpack.c.l.b16 %v87
    %v773 = vunpack.c.l.b16 %v88
    %v774 = vunpack.c.l.b16 %v89
    %v775 = vunpack.c.l.b16 %v90
    %v776 = vunpack.c.l.b16 %v91
    %v777 = vunpack.c.l.b16 %v92
    %v778 = vunpack.c.l.b16 %v93
    %v779 = vunpack.c.l.b16 %v94
    %v780 = vunpack.c.l.b16 %v95
    %v781 = vunpack.c.l.b16 %v96
    %v782 = vunpack.c.l.b16 %v97
    %v783 = vunpack.c.l.b16 %v98
    %v784 = vunpack.c.l.b16 %v99
    %v785 = vunpack.c.l.b16 %v100
    %v786 = vunpack.c.l.b16 %v101
    %v787 = vunpack.c.l.b16 %v102
    %v788 = vunpack.c.l.b16 %v103
    %v789 = vunpack.c.l.b16 %v104
    %v790 = vunpack.c.l.b16 %v105
    %v791 = vunpack.c.l.b16 %v106
    %v792 = vunpack.c.l.b16 %v107
    %v793 = vunpack.c.l.b16 %v108
    %v794 = vunpack.c.l.b16 %v109
    %v795 = vunpack.c.l.b16 %v110
    %v796 = vunpack.c.l.b16 %v111
    %v797 = vunpack.c.l.b16 %v112
    %v798 = vunpack.c.l.b16 %v113
    %v799 = vunpack.c.l.b16 %v114
    %v800 = vpack.c.b16 %v769, %v768
    %v801 = vpack.c.b16 %v771, %v770
    %v802 = vpack.c.b16 %v773, %v772
    %v803 = vpack.c.b16 %v775, %v774
    %v804 = vpack.c.b16 %v777, %v776
    %v805 = vpack.c.b16 %v779, %v778
    %v806 = vpack.c.b16 %v781, %v780
    %v807 = vpack.c.b16 %v783, %v782
    %v808 = vpack.c.b16 %v785, %v784
    %v809 = vpack.c.b16 %v787, %v786
    %v810 = vpack.c.b16 %v789, %v788
    %v811 = vpack.c.b16 %v791, %v790
    %v812 = vpack.c.b16 %v793, %v792
    %v813 = vpack.c.b16 %v795, %v794
    %v814 = vpack.c.b16 %v797, %v796
    %v815 = vpack.c.b16 %v799, %v798
    %832 = vmatprep.subr.bf16.mxu0 0
    %833 = vmatpush1.bf16.msra.mxu0 %v800
    %834 = vmatprep.subr.bf16.mxu0 0
    %835 = vmatpush1.bf16.msra.mxu0 %v801
    %836 = vmatprep.subr.bf16.mxu0 0
    %837 = vmatpush1.bf16.msra.mxu0 %v802
    %838 = vmatprep.subr.bf16.mxu0 0
    %839 = vmatpush1.bf16.msra.mxu0 %v803
    %840 = vmatprep.subr.bf16.mxu0 0
    %841 = vmatpush1.bf16.msra.mxu0 %v804
    %842 = vmatprep.subr.bf16.mxu0 0
    %843 = vmatpush1.bf16.msra.mxu0 %v805
    %844 = vmatprep.subr.bf16.mxu0 0
    %845 = vmatpush1.bf16.msra.mxu0 %v806
    %846 = vmatprep.subr.bf16.mxu0 0
    %847 = vmatpush1.bf16.msra.mxu0 %v807
    %848 = vmatprep.subr.bf16.mxu0 0
    %849 = vmatpush1.bf16.msra.mxu0 %v808
    %850 = vmatprep.subr.bf16.mxu0 0
    %851 = vmatpush1.bf16.msra.mxu0 %v809
    %852 = vmatprep.subr.bf16.mxu0 0
    %853 = vmatpush1.bf16.msra.mxu0 %v810
    %854 = vmatprep.subr.bf16.mxu0 0
    %855 = vmatpush1.bf16.msra.mxu0 %v811
    %856 = vmatprep.subr.bf16.mxu0 0
    %857 = vmatpush1.bf16.msra.mxu0 %v812
    %858 = vmatprep.subr.bf16.mxu0 0
    %859 = vmatpush1.bf16.msra.mxu0 %v813
    %860 = vmatprep.subr.bf16.mxu0 0
    %861 = vmatpush1.bf16.msra.mxu0 %v814
    %862 = vmatprep.subr.bf16.mxu0 0
    %863 = vmatpush1.bf16.msra.mxu0 %v815
    %864 = vmatprep.mubr.bf16.mxu0 %v735
    %865 = vmatmul.mubr.bf16.gmra.mrb[0].mxu0 %v734
    %v866 = vpop.f32.mrb[0].mxu0
    %v867 = vadd.f32 0.0, %v866
    %v868 = vpop.f32.mrb[0].mxu0
    %v869 = vpop.f32.mrb[0].mxu0
    %v870 = vpop.f32.mrb[0].mxu0
    %871 = vdwg.mxu0
    %872 = vst [vmem:[#allocation2] sm:$0x1] %v867
    %s873 = scalar_lea.vmem %s0, 8
    %v874 = vld [vmem:[%s873] sm:$0xff]
    %v876 = vcombine.high %v874, %v874
    %878 = vrot.lane.b32.xlu0 %v874, 1
    %v879 = vpop.permute.xlu0 %878
    %880 = vrot.lane.b32.xlu0 %v876, 1
    %v881 = vpop.permute.xlu0 %880
    %v882 = vsel %vm128, %v879, %v881
    %v883 = vsel %vm128, %v881, %v879
    %v884 = vsel %vm119, 0.0, %v883
    %v885 = vsel %vm120, 0.0, %v882
    %v886 = vpack.c.bf16 %v884, %v884
    %v887 = vpack.c.bf16 %v885, %v885
    %888 = vrot.lane.b32.xlu0 %v874, 127
    %v889 = vpop.permute.xlu0 %888
    %890 = vrot.lane.b32.xlu0 %v876, 127
    %v891 = vpop.permute.xlu0 %890
    %v892 = vsel %vm141, %v889, %v891
    %v893 = vsel %vm141, %v891, %v889
    %v894 = vsel %vm135, 0.0, %v892
    %v895 = vsel %vm136, 0.0, %v893
    %v896 = vpack.c.bf16 %v894, %v894
    %v897 = vpack.c.bf16 %v895, %v895
    %v898 = vpack.c.bf16 %v874, %v874
    %v899 = vpack.c.bf16 %v876, %v876
    %v900 = vld [vmem:[%s2] sm:$0xf]
    %v901 = vld [vmem:[%s2 + $0x4] sm:$0xf]
    %v902 = vld [vmem:[%s2 + $0x8] sm:$0xf]
    %v903 = vld [vmem:[%s2 + $0xc] sm:$0xf]
    %v904 = vld [vmem:[%s2 + $0x10] sm:$0xf]
    %v905 = vld [vmem:[%s2 + $0x14] sm:$0xf]
    %v906 = vld [vmem:[%s2 + $0x18] sm:$0xf]
    %v907 = vld [vmem:[%s2 + $0x1c] sm:$0xf]
    %v908 = vld [vmem:[%s158] sm:$0xf]
    %v909 = vld [vmem:[%s158 + $0x4] sm:$0xf]
    %v910 = vld [vmem:[%s158 + $0x8] sm:$0xf]
    %v911 = vld [vmem:[%s158 + $0xc] sm:$0xf]
    %v912 = vld [vmem:[%s158 + $0x10] sm:$0xf]
    %v913 = vld [vmem:[%s158 + $0x14] sm:$0xf]
    %v914 = vld [vmem:[%s158 + $0x18] sm:$0xf]
    %v915 = vld [vmem:[%s158 + $0x1c] sm:$0xf]
    %v924 = vunpack.c.l.b16 %v908
    %v925 = vunpack.c.l.b16 %v909
    %v926 = vunpack.c.l.b16 %v910
    %v927 = vunpack.c.l.b16 %v911
    %v928 = vunpack.c.l.b16 %v912
    %v929 = vunpack.c.l.b16 %v913
    %v930 = vunpack.c.l.b16 %v914
    %v931 = vunpack.c.l.b16 %v915
    %v932 = vpack.c.b16 %v925, %v924
    %v933 = vpack.c.b16 %v927, %v926
    %v934 = vpack.c.b16 %v929, %v928
    %v935 = vpack.c.b16 %v931, %v930
    %v937 = vsel %vm187, %v932, 0
    %v940 = vsel %vm187, %v933, 0
    %v943 = vsel %vm187, %v934, 0
    %v946 = vsel %vm187, %v935, 0
    %v949 = vsel %vm200, %v898, 0
    %v952 = vsel %vm200, %v899, 0
    %954 = vmatprep.subr.bf16.mxu0 %v952
    %955 = vmatpush1.bf16.msra.mxu0 %v949
    %956 = vmatprep.subr.bf16.mxu0 0
    %957 = vmatpush1.bf16.msra.mxu0 0
    %958 = vmatprep.subr.bf16.mxu0 0
    %959 = vmatpush1.bf16.msra.mxu0 0
    %960 = vmatprep.subr.bf16.mxu0 0
    %961 = vmatpush1.bf16.msra.mxu0 0
    %962 = vmatprep.subr.bf16.mxu0 0
    %963 = vmatpush1.bf16.msra.mxu0 0
    %964 = vmatprep.subr.bf16.mxu0 0
    %965 = vmatpush1.bf16.msra.mxu0 0
    %966 = vmatprep.subr.bf16.mxu0 0
    %967 = vmatpush1.bf16.msra.mxu0 0
    %968 = vmatprep.subr.bf16.mxu0 0
    %969 = vmatpush1.bf16.msra.mxu0 0
    %970 = vmatprep.subr.bf16.mxu0 0
    %971 = vmatpush1.bf16.msra.mxu0 0
    %972 = vmatprep.subr.bf16.mxu0 0
    %973 = vmatpush1.bf16.msra.mxu0 0
    %974 = vmatprep.subr.bf16.mxu0 0
    %975 = vmatpush1.bf16.msra.mxu0 0
    %976 = vmatprep.subr.bf16.mxu0 0
    %977 = vmatpush1.bf16.msra.mxu0 0
    %978 = vmatprep.subr.bf16.mxu0 0
    %979 = vmatpush1.bf16.msra.mxu0 0
    %980 = vmatprep.subr.bf16.mxu0 0
    %981 = vmatpush1.bf16.msra.mxu0 0
    %982 = vmatprep.subr.bf16.mxu0 0
    %983 = vmatpush1.bf16.msra.mxu0 0
    %984 = vmatprep.subr.bf16.mxu0 0
    %985 = vmatpush1.bf16.msra.mxu0 0
    %986 = vmatprep.mubr.bf16.mxu0 0
    %987 = vmatmul.mubr.bf16.gmra.mrb[0].mxu0 %v937
    %v988 = vpop.f32.mrb[0].mxu0
    %v989 = vadd.f32 0.0, %v988
    %v990 = vpop.f32.mrb[0].mxu0
    %v991 = vadd.f32 0.0, %v990
    %v992 = vpop.f32.mrb[0].mxu0
    %v993 = vadd.f32 0.0, %v992
    %v994 = vpop.f32.mrb[0].mxu0
    %v995 = vadd.f32 0.0, %v994
    %996 = vmatprep.mubr.bf16.mxu0 0
    %997 = vmatmul.mubr.bf16.gmra.mrb[0].mxu0 %v940
    %v998 = vpop.f32.mrb[0].mxu0
    %v999 = vadd.f32 0.0, %v998
    %v1000 = vpop.f32.mrb[0].mxu0
    %v1001 = vadd.f32 0.0, %v1000
    %v1002 = vpop.f32.mrb[0].mxu0
    %v1003 = vadd.f32 0.0, %v1002
    %v1004 = vpop.f32.mrb[0].mxu0
    %v1005 = vadd.f32 0.0, %v1004
    %1006 = vmatprep.mubr.bf16.mxu0 0
    %1007 = vmatmul.mubr.bf16.gmra.mrb[0].mxu0 %v943
    %v1008 = vpop.f32.mrb[0].mxu0
    %v1009 = vadd.f32 0.0, %v1008
    %v1010 = vpop.f32.mrb[0].mxu0
    %v1011 = vadd.f32 0.0, %v1010
    %v1012 = vpop.f32.mrb[0].mxu0
    %v1013 = vadd.f32 0.0, %v1012
    %v1014 = vpop.f32.mrb[0].mxu0
    %v1015 = vadd.f32 0.0, %v1014
    %1016 = vmatprep.mubr.bf16.mxu0 0
    %1017 = vmatmul.mubr.bf16.gmra.mrb[0].mxu0 %v946
    %v1018 = vpop.f32.mrb[0].mxu0
    %v1019 = vadd.f32 0.0, %v1018
    %v1020 = vpop.f32.mrb[0].mxu0
    %v1021 = vadd.f32 0.0, %v1020
    %v1022 = vpop.f32.mrb[0].mxu0
    %v1023 = vadd.f32 0.0, %v1022
    %v1024 = vpop.f32.mrb[0].mxu0
    %v1025 = vadd.f32 0.0, %v1024
    %1026 = vdwg.mxu0
    %v1035 = vunpack.c.l.b16 %v900
    %v1036 = vunpack.c.l.b16 %v901
    %v1037 = vunpack.c.l.b16 %v902
    %v1038 = vunpack.c.l.b16 %v903
    %v1039 = vunpack.c.l.b16 %v904
    %v1040 = vunpack.c.l.b16 %v905
    %v1041 = vunpack.c.l.b16 %v906
    %v1042 = vunpack.c.l.b16 %v907
    %v1043 = vpack.c.b16 %v1036, %v1035
    %v1044 = vpack.c.b16 %v1038, %v1037
    %v1045 = vpack.c.b16 %v1040, %v1039
    %v1046 = vpack.c.b16 %v1042, %v1041
    %v1048 = vsel %vm187, %v1043, 0
    %v1051 = vsel %vm187, %v1044, 0
    %v1054 = vsel %vm187, %v1045, 0
    %v1057 = vsel %vm187, %v1046, 0
    %v1060 = vsel %vm200, %v886, 0
    %v1063 = vsel %vm200, %v887, 0
    %1065 = vmatprep.subr.bf16.mxu0 %v1063
    %1066 = vmatpush1.bf16.msra.mxu0 %v1060
    %1067 = vmatprep.subr.bf16.mxu0 0
    %1068 = vmatpush1.bf16.msra.mxu0 0
    %1069 = vmatprep.subr.bf16.mxu0 0
    %1070 = vmatpush1.bf16.msra.mxu0 0
    %1071 = vmatprep.subr.bf16.mxu0 0
    %1072 = vmatpush1.bf16.msra.mxu0 0
    %1073 = vmatprep.subr.bf16.mxu0 0
    %1074 = vmatpush1.bf16.msra.mxu0 0
    %1075 = vmatprep.subr.bf16.mxu0 0
    %1076 = vmatpush1.bf16.msra.mxu0 0
    %1077 = vmatprep.subr.bf16.mxu0 0
    %1078 = vmatpush1.bf16.msra.mxu0 0
    %1079 = vmatprep.subr.bf16.mxu0 0
    %1080 = vmatpush1.bf16.msra.mxu0 0
    %1081 = vmatprep.subr.bf16.mxu0 0
    %1082 = vmatpush1.bf16.msra.mxu0 0
    %1083 = vmatprep.subr.bf16.mxu0 0
    %1084 = vmatpush1.bf16.msra.mxu0 0
    %1085 = vmatprep.subr.bf16.mxu0 0
    %1086 = vmatpush1.bf16.msra.mxu0 0
    %1087 = vmatprep.subr.bf16.mxu0 0
    %1088 = vmatpush1.bf16.msra.mxu0 0
    %1089 = vmatprep.subr.bf16.mxu0 0
    %1090 = vmatpush1.bf16.msra.mxu0 0
    %1091 = vmatprep.subr.bf16.mxu0 0
    %1092 = vmatpush1.bf16.msra.mxu0 0
    %1093 = vmatprep.subr.bf16.mxu0 0
    %1094 = vmatpush1.bf16.msra.mxu0 0
    %1095 = vmatprep.subr.bf16.mxu0 0
    %1096 = vmatpush1.bf16.msra.mxu0 0
    %1097 = vmatprep.mubr.bf16.mxu0 0
    %1098 = vmatmul.mubr.bf16.gmra.mrb[0].mxu0 %v1048
    %v1099 = vpop.f32.mrb[0].mxu0
    %v1100 = vadd.f32 %v989, %v1099
    %v1101 = vpop.f32.mrb[0].mxu0
    %v1102 = vadd.f32 %v991, %v1101
    %v1103 = vpop.f32.mrb[0].mxu0
    %v1104 = vadd.f32 %v993, %v1103
    %v1105 = vpop.f32.mrb[0].mxu0
    %v1106 = vadd.f32 %v995, %v1105
    %1107 = vmatprep.mubr.bf16.mxu0 0
    %1108 = vmatmul.mubr.bf16.gmra.mrb[0].mxu0 %v1051
    %v1109 = vpop.f32.mrb[0].mxu0
    %v1110 = vadd.f32 %v999, %v1109
    %v1111 = vpop.f32.mrb[0].mxu0
    %v1112 = vadd.f32 %v1001, %v1111
    %v1113 = vpop.f32.mrb[0].mxu0
    %v1114 = vadd.f32 %v1003, %v1113
    %v1115 = vpop.f32.mrb[0].mxu0
    %v1116 = vadd.f32 %v1005, %v1115
    %1117 = vmatprep.mubr.bf16.mxu0 0
    %1118 = vmatmul.mubr.bf16.gmra.mrb[0].mxu0 %v1054
    %v1119 = vpop.f32.mrb[0].mxu0
    %v1120 = vadd.f32 %v1009, %v1119
    %v1121 = vpop.f32.mrb[0].mxu0
    %v1122 = vadd.f32 %v1011, %v1121
    %v1123 = vpop.f32.mrb[0].mxu0
    %v1124 = vadd.f32 %v1013, %v1123
    %v1125 = vpop.f32.mrb[0].mxu0
    %v1126 = vadd.f32 %v1015, %v1125
    %1127 = vmatprep.mubr.bf16.mxu0 0
    %1128 = vmatmul.mubr.bf16.gmra.mrb[0].mxu0 %v1057
    %v1129 = vpop.f32.mrb[0].mxu0
    %v1130 = vadd.f32 %v1019, %v1129
    %v1131 = vpop.f32.mrb[0].mxu0
    %v1132 = vadd.f32 %v1021, %v1131
    %v1133 = vpop.f32.mrb[0].mxu0
    %v1134 = vadd.f32 %v1023, %v1133
    %v1135 = vpop.f32.mrb[0].mxu0
    %v1136 = vadd.f32 %v1025, %v1135
    %1137 = vdwg.mxu0
    %v1138 = vld [vmem:[%s391] sm:$0xf]
    %v1139 = vld [vmem:[%s391 + $0x4] sm:$0xf]
    %v1140 = vld [vmem:[%s391 + $0x8] sm:$0xf]
    %v1141 = vld [vmem:[%s391 + $0xc] sm:$0xf]
    %v1142 = vld [vmem:[%s391 + $0x10] sm:$0xf]
    %v1143 = vld [vmem:[%s391 + $0x14] sm:$0xf]
    %v1144 = vld [vmem:[%s391 + $0x18] sm:$0xf]
    %v1145 = vld [vmem:[%s391 + $0x1c] sm:$0xf]
    %v1154 = vunpack.c.l.b16 %v1138
    %v1155 = vunpack.c.l.b16 %v1139
    %v1156 = vunpack.c.l.b16 %v1140
    %v1157 = vunpack.c.l.b16 %v1141
    %v1158 = vunpack.c.l.b16 %v1142
    %v1159 = vunpack.c.l.b16 %v1143
    %v1160 = vunpack.c.l.b16 %v1144
    %v1161 = vunpack.c.l.b16 %v1145
    %v1162 = vpack.c.b16 %v1155, %v1154
    %v1163 = vpack.c.b16 %v1157, %v1156
    %v1164 = vpack.c.b16 %v1159, %v1158
    %v1165 = vpack.c.b16 %v1161, %v1160
    %v1167 = vsel %vm187, %v1162, 0
    %v1170 = vsel %vm187, %v1163, 0
    %v1173 = vsel %vm187, %v1164, 0
    %v1176 = vsel %vm187, %v1165, 0
    %v1179 = vsel %vm200, %v896, 0
    %v1182 = vsel %vm200, %v897, 0
    %1184 = vmatprep.subr.bf16.mxu0 %v1182
    %1185 = vmatpush1.bf16.msra.mxu0 %v1179
    %1186 = vmatprep.subr.bf16.mxu0 0
    %1187 = vmatpush1.bf16.msra.mxu0 0
    %1188 = vmatprep.subr.bf16.mxu0 0
    %1189 = vmatpush1.bf16.msra.mxu0 0
    %1190 = vmatprep.subr.bf16.mxu0 0
    %1191 = vmatpush1.bf16.msra.mxu0 0
    %1192 = vmatprep.subr.bf16.mxu0 0
    %1193 = vmatpush1.bf16.msra.mxu0 0
    %1194 = vmatprep.subr.bf16.mxu0 0
    %1195 = vmatpush1.bf16.msra.mxu0 0
    %1196 = vmatprep.subr.bf16.mxu0 0
    %1197 = vmatpush1.bf16.msra.mxu0 0
    %1198 = vmatprep.subr.bf16.mxu0 0
    %1199 = vmatpush1.bf16.msra.mxu0 0
    %1200 = vmatprep.subr.bf16.mxu0 0
    %1201 = vmatpush1.bf16.msra.mxu0 0
    %1202 = vmatprep.subr.bf16.mxu0 0
    %1203 = vmatpush1.bf16.msra.mxu0 0
    %1204 = vmatprep.subr.bf16.mxu0 0
    %1205 = vmatpush1.bf16.msra.mxu0 0
    %1206 = vmatprep.subr.bf16.mxu0 0
    %1207 = vmatpush1.bf16.msra.mxu0 0
    %1208 = vmatprep.subr.bf16.mxu0 0
    %1209 = vmatpush1.bf16.msra.mxu0 0
    %1210 = vmatprep.subr.bf16.mxu0 0
    %1211 = vmatpush1.bf16.msra.mxu0 0
    %1212 = vmatprep.subr.bf16.mxu0 0
    %1213 = vmatpush1.bf16.msra.mxu0 0
    %1214 = vmatprep.subr.bf16.mxu0 0
    %1215 = vmatpush1.bf16.msra.mxu0 0
    %1216 = vmatprep.mubr.bf16.mxu0 0
    %1217 = vmatmul.mubr.bf16.gmra.mrb[0].mxu0 %v1167
    %v1218 = vpop.f32.mrb[0].mxu0
    %v1219 = vadd.f32 0.0, %v1218
    %v1220 = vpop.f32.mrb[0].mxu0
    %v1221 = vadd.f32 0.0, %v1220
    %v1222 = vpop.f32.mrb[0].mxu0
    %v1223 = vadd.f32 0.0, %v1222
    %v1224 = vpop.f32.mrb[0].mxu0
    %v1225 = vadd.f32 0.0, %v1224
    %1226 = vmatprep.mubr.bf16.mxu0 0
    %1227 = vmatmul.mubr.bf16.gmra.mrb[0].mxu0 %v1170
    %v1228 = vpop.f32.mrb[0].mxu0
    %v1229 = vadd.f32 0.0, %v1228
    %v1230 = vpop.f32.mrb[0].mxu0
    %v1231 = vadd.f32 0.0, %v1230
    %v1232 = vpop.f32.mrb[0].mxu0
    %v1233 = vadd.f32 0.0, %v1232
    %v1234 = vpop.f32.mrb[0].mxu0
    %v1235 = vadd.f32 0.0, %v1234
    %1236 = vmatprep.mubr.bf16.mxu0 0
    %1237 = vmatmul.mubr.bf16.gmra.mrb[0].mxu0 %v1173
    %v1238 = vpop.f32.mrb[0].mxu0
    %v1239 = vadd.f32 0.0, %v1238
    %v1240 = vpop.f32.mrb[0].mxu0
    %v1241 = vadd.f32 0.0, %v1240
    %v1242 = vpop.f32.mrb[0].mxu0
    %v1243 = vadd.f32 0.0, %v1242
    %v1244 = vpop.f32.mrb[0].mxu0
    %v1245 = vadd.f32 0.0, %v1244
    %1246 = vmatprep.mubr.bf16.mxu0 0
    %1247 = vmatmul.mubr.bf16.gmra.mrb[0].mxu0 %v1176
    %v1248 = vpop.f32.mrb[0].mxu0
    %v1249 = vadd.f32 0.0, %v1248
    %v1250 = vpop.f32.mrb[0].mxu0
    %v1251 = vadd.f32 0.0, %v1250
    %v1252 = vpop.f32.mrb[0].mxu0
    %v1253 = vadd.f32 0.0, %v1252
    %v1254 = vpop.f32.mrb[0].mxu0
    %v1255 = vadd.f32 0.0, %v1254
    %1256 = vdwg.mxu0
    %v1257 = vadd.f32 %v1100, %v1219
    %v1258 = vadd.f32 %v1102, %v1221
    %v1259 = vadd.f32 %v1104, %v1223
    %v1260 = vadd.f32 %v1106, %v1225
    %v1261 = vadd.f32 %v1110, %v1229
    %v1262 = vadd.f32 %v1112, %v1231
    %v1263 = vadd.f32 %v1114, %v1233
    %v1264 = vadd.f32 %v1116, %v1235
    %v1265 = vadd.f32 %v1120, %v1239
    %v1266 = vadd.f32 %v1122, %v1241
    %v1267 = vadd.f32 %v1124, %v1243
    %v1268 = vadd.f32 %v1126, %v1245
    %v1269 = vadd.f32 %v1130, %v1249
    %v1270 = vadd.f32 %v1132, %v1251
    %v1271 = vadd.f32 %v1134, %v1253
    %v1272 = vadd.f32 %v1136, %v1255
    %v1273 = vld [vmem:[%s3] sm:$0xff]
    %v1274 = vld [vmem:[%s3 + $0x8] sm:$0xff]
    %v1275 = vld [vmem:[%s3 + $0x10] sm:$0xff]
    %v1276 = vld [vmem:[%s3 + $0x18] sm:$0xff]
    %v1277 = vld [vmem:[%s3 + $0x20] sm:$0xff]
    %v1278 = vld [vmem:[%s3 + $0x28] sm:$0xff]
    %v1279 = vld [vmem:[%s3 + $0x30] sm:$0xff]
    %v1280 = vld [vmem:[%s3 + $0x38] sm:$0xff]
    %1282 = vset.pattern.permute.xlu0 0
    %1283 = vperm.xlu0 %1282, %v1273
    %v1284 = vpop.permute.xlu0 %1283
    %1287 = vset.pattern.permute.xlu0 0
    %1288 = vperm.xlu0 %1287, %v1274
    %v1289 = vpop.permute.xlu0 %1288
    %1292 = vset.pattern.permute.xlu0 0
    %1293 = vperm.xlu0 %1292, %v1275
    %v1294 = vpop.permute.xlu0 %1293
    %1297 = vset.pattern.permute.xlu0 0
    %1298 = vperm.xlu0 %1297, %v1276
    %v1299 = vpop.permute.xlu0 %1298
    %1302 = vset.pattern.permute.xlu0 0
    %1303 = vperm.xlu0 %1302, %v1277
    %v1304 = vpop.permute.xlu0 %1303
    %1307 = vset.pattern.permute.xlu0 0
    %1308 = vperm.xlu0 %1307, %v1278
    %v1309 = vpop.permute.xlu0 %1308
    %1312 = vset.pattern.permute.xlu0 0
    %1313 = vperm.xlu0 %1312, %v1279
    %v1314 = vpop.permute.xlu0 %1313
    %1317 = vset.pattern.permute.xlu0 0
    %1318 = vperm.xlu0 %1317, %v1280
    %v1319 = vpop.permute.xlu0 %1318
    %v1321 = vadd.f32 %v1257, %v1284
    %v1322 = vadd.f32 %v1258, %v1284
    %v1323 = vadd.f32 %v1259, %v1289
    %v1324 = vadd.f32 %v1260, %v1289
    %v1325 = vadd.f32 %v1261, %v1294
    %v1326 = vadd.f32 %v1262, %v1294
    %v1327 = vadd.f32 %v1263, %v1299
    %v1328 = vadd.f32 %v1264, %v1299
    %v1329 = vadd.f32 %v1265, %v1304
    %v1330 = vadd.f32 %v1266, %v1304
    %v1331 = vadd.f32 %v1267, %v1309
    %v1332 = vadd.f32 %v1268, %v1309
    %v1333 = vadd.f32 %v1269, %v1314
    %v1334 = vadd.f32 %v1270, %v1314
    %v1335 = vadd.f32 %v1271, %v1319
    %v1336 = vadd.f32 %v1272, %v1319
    %v1337 = vmax.f32 %v1321, 0.0
    %v1338 = vmax.f32 %v1322, 0.0
    %v1339 = vmax.f32 %v1323, 0.0
    %v1340 = vmax.f32 %v1324, 0.0
    %v1341 = vmax.f32 %v1325, 0.0
    %v1342 = vmax.f32 %v1326, 0.0
    %v1343 = vmax.f32 %v1327, 0.0
    %v1344 = vmax.f32 %v1328, 0.0
    %v1345 = vmax.f32 %v1329, 0.0
    %v1346 = vmax.f32 %v1330, 0.0
    %v1347 = vmax.f32 %v1331, 0.0
    %v1348 = vmax.f32 %v1332, 0.0
    %v1349 = vmax.f32 %v1333, 0.0
    %v1350 = vmax.f32 %v1334, 0.0
    %v1351 = vmax.f32 %v1335, 0.0
    %v1352 = vmax.f32 %v1336, 0.0
    %v1353 = vpack.c.bf16 %v1339, %v1337
    %v1354 = vpack.c.bf16 %v1340, %v1338
    %v1355 = vpack.c.bf16 %v1343, %v1341
    %v1356 = vpack.c.bf16 %v1344, %v1342
    %v1357 = vpack.c.bf16 %v1347, %v1345
    %v1358 = vpack.c.bf16 %v1348, %v1346
    %v1359 = vpack.c.bf16 %v1351, %v1349
    %v1360 = vpack.c.bf16 %v1352, %v1350
    %v1361 = vld [vmem:[%s4] sm:$0x3]
    %v1363 = vsel %vm616, %v1361, 0
    %1365 = vmatprep.subr.bf16.mxu0 %v1354
    %1366 = vmatpush1.bf16.msra.mxu0 %v1353
    %1367 = vmatprep.subr.bf16.mxu0 %v1356
    %1368 = vmatpush1.bf16.msra.mxu0 %v1355
    %1369 = vmatprep.subr.bf16.mxu0 %v1358
    %1370 = vmatpush1.bf16.msra.mxu0 %v1357
    %1371 = vmatprep.subr.bf16.mxu0 %v1360
    %1372 = vmatpush1.bf16.msra.mxu0 %v1359
    %1373 = vmatprep.subr.bf16.mxu0 0
    %1374 = vmatpush1.bf16.msra.mxu0 0
    %1375 = vmatprep.subr.bf16.mxu0 0
    %1376 = vmatpush1.bf16.msra.mxu0 0
    %1377 = vmatprep.subr.bf16.mxu0 0
    %1378 = vmatpush1.bf16.msra.mxu0 0
    %1379 = vmatprep.subr.bf16.mxu0 0
    %1380 = vmatpush1.bf16.msra.mxu0 0
    %1381 = vmatprep.subr.bf16.mxu0 0
    %1382 = vmatpush1.bf16.msra.mxu0 0
    %1383 = vmatprep.subr.bf16.mxu0 0
    %1384 = vmatpush1.bf16.msra.mxu0 0
    %1385 = vmatprep.subr.bf16.mxu0 0
    %1386 = vmatpush1.bf16.msra.mxu0 0
    %1387 = vmatprep.subr.bf16.mxu0 0
    %1388 = vmatpush1.bf16.msra.mxu0 0
    %1389 = vmatprep.subr.bf16.mxu0 0
    %1390 = vmatpush1.bf16.msra.mxu0 0
    %1391 = vmatprep.subr.bf16.mxu0 0
    %1392 = vmatpush1.bf16.msra.mxu0 0
    %1393 = vmatprep.subr.bf16.mxu0 0
    %1394 = vmatpush1.bf16.msra.mxu0 0
    %1395 = vmatprep.subr.bf16.mxu0 0
    %1396 = vmatpush1.bf16.msra.mxu0 0
    %1397 = vmatprep.mubr.bf16.mxu0 0
    %1398 = vmatmul.mubr.bf16.gmra.mrb[0].mxu0 %v1363
    %v1399 = vpop.f32.mrb[0].mxu0
    %v1400 = vadd.f32 0.0, %v1399
    %v1401 = vpop.f32.mrb[0].mxu0
    %v1402 = vadd.f32 0.0, %v1401
    %v1403 = vpop.f32.mrb[0].mxu0
    %v1404 = vpop.f32.mrb[0].mxu0
    %1405 = vdwg.mxu0
    %1406 = vrot.lane.b32.xlu0 %v1400, 1
    %v1407 = vpop.permute.xlu0 %1406
    %1408 = vrot.lane.b32.xlu0 %v1402, 1
    %v1409 = vpop.permute.xlu0 %1408
    %v1410 = vsel %vm128, %v1407, %v1409
    %v1411 = vsel %vm128, %v1409, %v1407
    %v1412 = vsel %vm119, 0.0, %v1411
    %v1413 = vsel %vm120, 0.0, %v1410
    %v1416 = vrot.slane %v1400, 1
    %v1417 = vrot.slane %v1402, 1
    %v1420 = vadd.f32 %v1412, %v1416
    %v1421 = vadd.f32 %v1413, %v1417
    %v1422 = vrot.slane %v1400, 2
    %v1423 = vrot.slane %v1402, 2
    %1426 = vrot.lane.b32.xlu0 %v1422, 127
    %v1427 = vpop.permute.xlu0 %1426
    %1428 = vrot.lane.b32.xlu0 %v1423, 127
    %v1429 = vpop.permute.xlu0 %1428
    %v1430 = vsel %vm141, %v1427, %v1429
    %v1431 = vsel %vm141, %v1429, %v1427
    %v1432 = vsel %vm135, 0.0, %v1430
    %v1433 = vsel %vm136, 0.0, %v1431
    %v1434 = vadd.f32 %v1420, %v1432
    %v1435 = vadd.f32 %v1421, %v1433
    %v1436 = vld [vmem:[#allocation3] sm:$0x1]
    %1438 = vset.pattern.permute.xlu0 0
    %1439 = vperm.xlu0 %1438, %v1436
    %v1440 = vpop.permute.xlu0 %1439
    %v1442 = vlaneseq
    %v1443 = vshrl.u32 %v1442, 7
    %v1444 = vsub.s32 0, %v1443
    %v1445 = vrot.slane %v1440, %v1444
    %v1446 = vadd.f32 %v1434, %v1445
    %v1447 = vadd.f32 %v1435, %v1445
    %v1448 = vmax.f32 %v1446, 0.0
    %v1449 = vmax.f32 %v1447, 0.0
    %v1450 = vsel %vm705, %v1448, 0.0
    %v1451 = vsel %vm705, %v1449, 0.0
    %v1452 = vadd.f32 %v1450, %v1451
    %1453 = vadd.xlane.f32.xlu0 %v1452
    %v1454 = vpop.xlane.xlu0 %1453
    %v1455 = vrot.slane %v1454, 4
    %v1456 = vadd.f32 %v1454, %v1455
    %v1457 = vrot.slane %v1456, 2
    %v1458 = vadd.f32 %v1456, %v1457
    %v1459 = vrot.slane %v1458, 1
    %v1460 = vadd.f32 %v1458, %v1459
    %s1461 = vtos %v1460
    %s1462 = sadd.f32 %s718, %s1461
    %v1463 = vmul.f32 %v1448, %v1448
    %v1464 = vmul.f32 %v1449, %v1449
    %v1465 = vsel %vm705, %v1463, 0.0
    %v1466 = vsel %vm705, %v1464, 0.0
    %v1467 = vadd.f32 %v1465, %v1466
    %1468 = vadd.xlane.f32.xlu0 %v1467
    %v1469 = vpop.xlane.xlu0 %1468
    %v1470 = vrot.slane %v1469, 4
    %v1471 = vadd.f32 %v1469, %v1470
    %v1472 = vrot.slane %v1471, 2
    %v1473 = vadd.f32 %v1471, %v1472
    %v1474 = vrot.slane %v1473, 1
    %v1475 = vadd.f32 %v1473, %v1474
    %s1476 = vtos %v1475
    %s1477 = sadd.f32 %s733, %s1476
    %v1478 = vpack.c.bf16 %v1448, %v1448
    %v1479 = vpack.c.bf16 %v1449, %v1449
    %1480 = vmatprep.subr.bf16.mxu0 0
    %1481 = vmatpush1.bf16.msra.mxu0 %v800
    %1482 = vmatprep.subr.bf16.mxu0 0
    %1483 = vmatpush1.bf16.msra.mxu0 %v801
    %1484 = vmatprep.subr.bf16.mxu0 0
    %1485 = vmatpush1.bf16.msra.mxu0 %v802
    %1486 = vmatprep.subr.bf16.mxu0 0
    %1487 = vmatpush1.bf16.msra.mxu0 %v803
    %1488 = vmatprep.subr.bf16.mxu0 0
    %1489 = vmatpush1.bf16.msra.mxu0 %v804
    %1490 = vmatprep.subr.bf16.mxu0 0
    %1491 = vmatpush1.bf16.msra.mxu0 %v805
    %1492 = vmatprep.subr.bf16.mxu0 0
    %1493 = vmatpush1.bf16.msra.mxu0 %v806
    %1494 = vmatprep.subr.bf16.mxu0 0
    %1495 = vmatpush1.bf16.msra.mxu0 %v807
    %1496 = vmatprep.subr.bf16.mxu0 0
    %1497 = vmatpush1.bf16.msra.mxu0 %v808
    %1498 = vmatprep.subr.bf16.mxu0 0
    %1499 = vmatpush1.bf16.msra.mxu0 %v809
    %1500 = vmatprep.subr.bf16.mxu0 0
    %1501 = vmatpush1.bf16.msra.mxu0 %v810
    %1502 = vmatprep.subr.bf16.mxu0 0
    %1503 = vmatpush1.bf16.msra.mxu0 %v811
    %1504 = vmatprep.subr.bf16.mxu0 0
    %1505 = vmatpush1.bf16.msra.mxu0 %v812
    %1506 = vmatprep.subr.bf16.mxu0 0
    %1507 = vmatpush1.bf16.msra.mxu0 %v813
    %1508 = vmatprep.subr.bf16.mxu0 0
    %1509 = vmatpush1.bf16.msra.mxu0 %v814
    %1510 = vmatprep.subr.bf16.mxu0 0
    %1511 = vmatpush1.bf16.msra.mxu0 %v815
    %1512 = vmatprep.mubr.bf16.mxu0 %v1479
    %1513 = vmatmul.mubr.bf16.gmra.mrb[0].mxu0 %v1478
    %v1514 = vpop.f32.mrb[0].mxu0
    %v1515 = vadd.f32 0.0, %v1514
    %v1516 = vpop.f32.mrb[0].mxu0
    %v1517 = vpop.f32.mrb[0].mxu0
    %v1518 = vpop.f32.mrb[0].mxu0
    %1519 = vdwg.mxu0
    %1520 = vst [vmem:[#allocation2 + $0x1] sm:$0x1] %v1515
    %s1521 = smul.f32 %s1462, 0.001953125
    %s1522 = smul.f32 %s1477, 0.001953125
    %s1523 = smul.f32 %s1521, %s1521
    %s1524 = ssub.f32 %s1522, %s1523
    %s1525 = sadd.f32 %s1524, 1e-05
    %v1526 = vstv %s1525
    %v1527 = vrsqrt.pop %v1526
    %s1528 = vtos %v1527
    %v1529 = vld [vmem:[#allocation4] sm:$0x1]
    %v1530 = vstv %s1528
    %v1531 = vmul.f32 %v1530, %v1529
    %v1532 = vld [vmem:[#allocation5] sm:$0x1]
    %v1533 = vstv %s1521
    %v1534 = vmul.f32 %v1533, %v1531
    %v1535 = vsub.f32 %v1532, %v1534
    %v1536 = vld [vmem:[#allocation2] sm:$0x3]
    %v1538 = vlaneseq
    %v1539 = vshrl.u32 %v1538, 7
    %v1540 = vsub.s32 0, %v1539
    %v1541 = vrot.slane %v1531, %v1540
    %1542 = vset.pattern.permute.xlu0 0
    %1543 = vperm.xlu0 %1542, %v1541
    %v1544 = vpop.permute.xlu0 %1543
    %v1546 = vmul.f32 %v1536, %v1544
    %v1548 = vlaneseq
    %v1549 = vshrl.u32 %v1548, 7
    %v1550 = vsub.s32 0, %v1549
    %v1551 = vrot.slane %v1535, %v1550
    %1552 = vset.pattern.permute.xlu0 0
    %1553 = vperm.xlu0 %1552, %v1551
    %v1554 = vpop.permute.xlu0 %1553
    %v1556 = vadd.f32 %v1546, %v1554
    %v1557 = vpack.c.bf16 %v1556, %v1556
    %v1558 = vld [vmem:[%s8] sm:$0xff]
    %v1559 = vld [vmem:[%s8 + $0x8] sm:$0xff]
    %v1560 = vld [vmem:[%s8 + $0x10] sm:$0xff]
    %v1561 = vld [vmem:[%s8 + $0x18] sm:$0xff]
    %v1562 = vld [vmem:[%s8 + $0x20] sm:$0xff]
    %v1563 = vld [vmem:[%s8 + $0x28] sm:$0xff]
    %v1564 = vld [vmem:[%s8 + $0x30] sm:$0xff]
    %v1565 = vld [vmem:[%s8 + $0x38] sm:$0xff]
    %v1566 = vld [vmem:[%s8 + $0x40] sm:$0xff]
    %v1567 = vld [vmem:[%s8 + $0x48] sm:$0xff]
    %v1568 = vld [vmem:[%s8 + $0x50] sm:$0xff]
    %v1569 = vld [vmem:[%s8 + $0x58] sm:$0xff]
    %v1570 = vld [vmem:[%s8 + $0x60] sm:$0xff]
    %v1571 = vld [vmem:[%s8 + $0x68] sm:$0xff]
    %v1572 = vld [vmem:[%s8 + $0x70] sm:$0xff]
    %v1573 = vld [vmem:[%s8 + $0x78] sm:$0xff]
    %v1574 = vld [vmem:[%s8 + $0x80] sm:$0xff]
    %v1575 = vld [vmem:[%s8 + $0x88] sm:$0xff]
    %v1576 = vld [vmem:[%s8 + $0x90] sm:$0xff]
    %v1577 = vld [vmem:[%s8 + $0x98] sm:$0xff]
    %v1578 = vld [vmem:[%s8 + $0xa0] sm:$0xff]
    %v1579 = vld [vmem:[%s8 + $0xa8] sm:$0xff]
    %v1580 = vld [vmem:[%s8 + $0xb0] sm:$0xff]
    %v1581 = vld [vmem:[%s8 + $0xb8] sm:$0xff]
    %v1582 = vld [vmem:[%s8 + $0xc0] sm:$0xff]
    %v1583 = vld [vmem:[%s8 + $0xc8] sm:$0xff]
    %v1584 = vld [vmem:[%s8 + $0xd0] sm:$0xff]
    %v1585 = vld [vmem:[%s8 + $0xd8] sm:$0xff]
    %v1586 = vld [vmem:[%s8 + $0xe0] sm:$0xff]
    %v1587 = vld [vmem:[%s8 + $0xe8] sm:$0xff]
    %v1588 = vld [vmem:[%s8 + $0xf0] sm:$0xff]
    %v1589 = vld [vmem:[%s8 + $0xf8] sm:$0xff]
    %v1590 = vld [vmem:[%s9] sm:$0xf]
    %v1592 = vlaneseq
    %v1593 = vshrl.u32 %v1592, 7
    %v1594 = vsub.s32 0, %v1593
    %v1595 = vrot.slane %v1590, %v1594
    %v1596 = vlaneseq
    %v1597 = vshrl.u32 %v1596, 7
    %v1598 = vsub.s32 1, %v1597
    %v1599 = vrot.slane %v1590, %v1598
    %v1600 = vlaneseq
    %v1601 = vshrl.u32 %v1600, 7
    %v1602 = vsub.s32 2, %v1601
    %v1603 = vrot.slane %v1590, %v1602
    %v1604 = vlaneseq
    %v1605 = vshrl.u32 %v1604, 7
    %v1606 = vsub.s32 3, %v1605
    %v1607 = vrot.slane %v1590, %v1606
    %v1644 = vunpack.c.l.b16 %v1558
    %v1645 = vunpack.c.h.b16 %v1558
    %v1646 = vunpack.c.l.b16 %v1559
    %v1647 = vunpack.c.h.b16 %v1559
    %v1648 = vunpack.c.l.b16 %v1560
    %v1649 = vunpack.c.h.b16 %v1560
    %v1650 = vunpack.c.l.b16 %v1561
    %v1651 = vunpack.c.h.b16 %v1561
    %v1652 = vunpack.c.l.b16 %v1562
    %v1653 = vunpack.c.h.b16 %v1562
    %v1654 = vunpack.c.l.b16 %v1563
    %v1655 = vunpack.c.h.b16 %v1563
    %v1656 = vunpack.c.l.b16 %v1564
    %v1657 = vunpack.c.h.b16 %v1564
    %v1658 = vunpack.c.l.b16 %v1565
    %v1659 = vunpack.c.h.b16 %v1565
    %v1660 = vunpack.c.l.b16 %v1566
    %v1661 = vunpack.c.h.b16 %v1566
    %v1662 = vunpack.c.l.b16 %v1567
    %v1663 = vunpack.c.h.b16 %v1567
    %v1664 = vunpack.c.l.b16 %v1568
    %v1665 = vunpack.c.h.b16 %v1568
    %v1666 = vunpack.c.l.b16 %v1569
    %v1667 = vunpack.c.h.b16 %v1569
    %v1668 = vunpack.c.l.b16 %v1570
    %v1669 = vunpack.c.h.b16 %v1570
    %v1670 = vunpack.c.l.b16 %v1571
    %v1671 = vunpack.c.h.b16 %v1571
    %v1672 = vunpack.c.l.b16 %v1572
    %v1673 = vunpack.c.h.b16 %v1572
    %v1674 = vunpack.c.l.b16 %v1573
    %v1675 = vunpack.c.h.b16 %v1573
    %v1676 = vunpack.c.l.b16 %v1574
    %v1677 = vunpack.c.h.b16 %v1574
    %v1678 = vunpack.c.l.b16 %v1575
    %v1679 = vunpack.c.h.b16 %v1575
    %v1680 = vunpack.c.l.b16 %v1576
    %v1681 = vunpack.c.h.b16 %v1576
    %v1682 = vunpack.c.l.b16 %v1577
    %v1683 = vunpack.c.h.b16 %v1577
    %v1684 = vunpack.c.l.b16 %v1578
    %v1685 = vunpack.c.h.b16 %v1578
    %v1686 = vunpack.c.l.b16 %v1579
    %v1687 = vunpack.c.h.b16 %v1579
    %v1688 = vunpack.c.l.b16 %v1580
    %v1689 = vunpack.c.h.b16 %v1580
    %v1690 = vunpack.c.l.b16 %v1581
    %v1691 = vunpack.c.h.b16 %v1581
    %v1692 = vunpack.c.l.b16 %v1582
    %v1693 = vunpack.c.h.b16 %v1582
    %v1694 = vunpack.c.l.b16 %v1583
    %v1695 = vunpack.c.h.b16 %v1583
    %v1696 = vunpack.c.l.b16 %v1584
    %v1697 = vunpack.c.h.b16 %v1584
    %v1698 = vunpack.c.l.b16 %v1585
    %v1699 = vunpack.c.h.b16 %v1585
    %v1700 = vunpack.c.l.b16 %v1586
    %v1701 = vunpack.c.h.b16 %v1586
    %v1702 = vunpack.c.l.b16 %v1587
    %v1703 = vunpack.c.h.b16 %v1587
    %v1704 = vunpack.c.l.b16 %v1588
    %v1705 = vunpack.c.h.b16 %v1588
    %v1706 = vunpack.c.l.b16 %v1589
    %v1707 = vunpack.c.h.b16 %v1589
    %v1708 = vpack.c.b16 %v1648, %v1644
    %v1709 = vpack.c.b16 %v1649, %v1645
    %v1710 = vpack.c.b16 %v1650, %v1646
    %v1711 = vpack.c.b16 %v1651, %v1647
    %v1712 = vpack.c.b16 %v1656, %v1652
    %v1713 = vpack.c.b16 %v1657, %v1653
    %v1714 = vpack.c.b16 %v1658, %v1654
    %v1715 = vpack.c.b16 %v1659, %v1655
    %v1716 = vpack.c.b16 %v1664, %v1660
    %v1717 = vpack.c.b16 %v1665, %v1661
    %v1718 = vpack.c.b16 %v1666, %v1662
    %v1719 = vpack.c.b16 %v1667, %v1663
    %v1720 = vpack.c.b16 %v1672, %v1668
    %v1721 = vpack.c.b16 %v1673, %v1669
    %v1722 = vpack.c.b16 %v1674, %v1670
    %v1723 = vpack.c.b16 %v1675, %v1671
    %v1724 = vpack.c.b16 %v1680, %v1676
    %v1725 = vpack.c.b16 %v1681, %v1677
    %v1726 = vpack.c.b16 %v1682, %v1678
    %v1727 = vpack.c.b16 %v1683, %v1679
    %v1728 = vpack.c.b16 %v1688, %v1684
    %v1729 = vpack.c.b16 %v1689, %v1685
    %v1730 = vpack.c.b16 %v1690, %v1686
    %v1731 = vpack.c.b16 %v1691, %v1687
    %v1732 = vpack.c.b16 %v1696, %v1692
    %v1733 = vpack.c.b16 %v1697, %v1693
    %v1734 = vpack.c.b16 %v1698, %v1694
    %v1735 = vpack.c.b16 %v1699, %v1695
    %v1736 = vpack.c.b16 %v1704, %v1700
    %v1737 = vpack.c.b16 %v1705, %v1701
    %v1738 = vpack.c.b16 %v1706, %v1702
    %v1739 = vpack.c.b16 %v1707, %v1703
    %1772 = vmatprep.subr.bf16.mxu0 %v1709
    %1773 = vmatpush1.bf16.msra.mxu0 %v1708
    %1774 = vmatprep.subr.bf16.mxu0 %v1713
    %1775 = vmatpush1.bf16.msra.mxu0 %v1712
    %1776 = vmatprep.subr.bf16.mxu0 %v1717
    %1777 = vmatpush1.bf16.msra.mxu0 %v1716
    %1778 = vmatprep.subr.bf16.mxu0 %v1721
    %1779 = vmatpush1.bf16.msra.mxu0 %v1720
    %1780 = vmatprep.subr.bf16.mxu0 %v1725
    %1781 = vmatpush1.bf16.msra.mxu0 %v1724
    %1782 = vmatprep.subr.bf16.mxu0 %v1729
    %1783 = vmatpush1.bf16.msra.mxu0 %v1728
    %1784 = vmatprep.subr.bf16.mxu0 %v1733
    %1785 = vmatpush1.bf16.msra.mxu0 %v1732
    %1786 = vmatprep.subr.bf16.mxu0 %v1737
    %1787 = vmatpush1.bf16.msra.mxu0 %v1736
    %1788 = vmatprep.subr.bf16.mxu0 0
    %1789 = vmatpush1.bf16.msra.mxu0 0
    %1790 = vmatprep.subr.bf16.mxu0 0
    %1791 = vmatpush1.bf16.msra.mxu0 0
    %1792 = vmatprep.subr.bf16.mxu0 0
    %1793 = vmatpush1.bf16.msra.mxu0 0
    %1794 = vmatprep.subr.bf16.mxu0 0
    %1795 = vmatpush1.bf16.msra.mxu0 0
    %1796 = vmatprep.subr.bf16.mxu0 0
    %1797 = vmatpush1.bf16.msra.mxu0 0
    %1798 = vmatprep.subr.bf16.mxu0 0
    %1799 = vmatpush1.bf16.msra.mxu0 0
    %1800 = vmatprep.subr.bf16.mxu0 0
    %1801 = vmatpush1.bf16.msra.mxu0 0
    %1802 = vmatprep.subr.bf16.mxu0 0
    %1803 = vmatpush1.bf16.msra.mxu0 0
    %1804 = vmatprep.mubr.bf16.mxu0 0
    %1805 = vmatmul.mubr.bf16.gmra.mrb[0].mxu0 %v1557
    %v1806 = vpop.f32.mrb[0].mxu0
    %v1807 = vadd.f32 %v1595, %v1806
    %v1808 = vpop.f32.mrb[0].mxu0
    %v1809 = vadd.f32 %v1599, %v1808
    %v1810 = vpop.f32.mrb[0].mxu0
    %v1811 = vpop.f32.mrb[0].mxu0
    %1812 = vdwg.mxu0
    %1813 = vmatprep.subr.bf16.mxu0 %v1711
    %1814 = vmatpush1.bf16.msra.mxu0 %v1710
    %1815 = vmatprep.subr.bf16.mxu0 %v1715
    %1816 = vmatpush1.bf16.msra.mxu0 %v1714
    %1817 = vmatprep.subr.bf16.mxu0 %v1719
    %1818 = vmatpush1.bf16.msra.mxu0 %v1718
    %1819 = vmatprep.subr.bf16.mxu0 %v1723
    %1820 = vmatpush1.bf16.msra.mxu0 %v1722
    %1821 = vmatprep.subr.bf16.mxu0 %v1727
    %1822 = vmatpush1.bf16.msra.mxu0 %v1726
    %1823 = vmatprep.subr.bf16.mxu0 %v1731
    %1824 = vmatpush1.bf16.msra.mxu0 %v1730
    %1825 = vmatprep.subr.bf16.mxu0 %v1735
    %1826 = vmatpush1.bf16.msra.mxu0 %v1734
    %1827 = vmatprep.subr.bf16.mxu0 %v1739
    %1828 = vmatpush1.bf16.msra.mxu0 %v1738
    %1829 = vmatprep.subr.bf16.mxu0 0
    %1830 = vmatpush1.bf16.msra.mxu0 0
    %1831 = vmatprep.subr.bf16.mxu0 0
    %1832 = vmatpush1.bf16.msra.mxu0 0
    %1833 = vmatprep.subr.bf16.mxu0 0
    %1834 = vmatpush1.bf16.msra.mxu0 0
    %1835 = vmatprep.subr.bf16.mxu0 0
    %1836 = vmatpush1.bf16.msra.mxu0 0
    %1837 = vmatprep.subr.bf16.mxu0 0
    %1838 = vmatpush1.bf16.msra.mxu0 0
    %1839 = vmatprep.subr.bf16.mxu0 0
    %1840 = vmatpush1.bf16.msra.mxu0 0
    %1841 = vmatprep.subr.bf16.mxu0 0
    %1842 = vmatpush1.bf16.msra.mxu0 0
    %1843 = vmatprep.subr.bf16.mxu0 0
    %1844 = vmatpush1.bf16.msra.mxu0 0
    %1845 = vmatprep.mubr.bf16.mxu0 0
    %1846 = vmatmul.mubr.bf16.gmra.mrb[0].mxu0 %v1557
    %v1847 = vpop.f32.mrb[0].mxu0
    %v1848 = vadd.f32 %v1603, %v1847
    %v1849 = vpop.f32.mrb[0].mxu0
    %v1850 = vadd.f32 %v1607, %v1849
    %v1851 = vpop.f32.mrb[0].mxu0
    %v1852 = vpop.f32.mrb[0].mxu0
    %1853 = vdwg.mxu0
    %v1854 = vmax.f32 %v1807, 0.0
    %v1855 = vmax.f32 %v1809, 0.0
    %v1856 = vmax.f32 %v1848, 0.0
    %v1857 = vmax.f32 %v1850, 0.0
    %v1858 = vpack.c.bf16 %v1854, %v1854
    %v1859 = vpack.c.bf16 %v1855, %v1855
    %v1860 = vpack.c.bf16 %v1856, %v1856
    %v1861 = vpack.c.bf16 %v1857, %v1857
    %v1862 = vld [vmem:[#allocation6] sm:$0xff]
    %v1863 = vld [vmem:[#allocation6 + $0x8] sm:$0xff]
    %v1864 = vld [vmem:[#allocation6 + $0x10] sm:$0xff]
    %v1865 = vld [vmem:[#allocation6 + $0x18] sm:$0xff]
    %v1866 = vld [vmem:[#allocation6 + $0x20] sm:$0xff]
    %v1867 = vld [vmem:[#allocation6 + $0x28] sm:$0xff]
    %v1868 = vld [vmem:[#allocation6 + $0x30] sm:$0xff]
    %v1869 = vld [vmem:[#allocation6 + $0x38] sm:$0xff]
    %v1870 = vld [vmem:[#allocation6 + $0x40] sm:$0xff]
    %v1871 = vld [vmem:[#allocation6 + $0x48] sm:$0xff]
    %v1872 = vld [vmem:[#allocation6 + $0x50] sm:$0xff]
    %v1873 = vld [vmem:[#allocation6 + $0x58] sm:$0xff]
    %v1874 = vld [vmem:[#allocation6 + $0x60] sm:$0xff]
    %v1875 = vld [vmem:[#allocation6 + $0x68] sm:$0xff]
    %v1876 = vld [vmem:[#allocation6 + $0x70] sm:$0xff]
    %v1877 = vld [vmem:[#allocation6 + $0x78] sm:$0xff]
    %v1878 = vld [vmem:[#allocation6 + $0x80] sm:$0xff]
    %v1879 = vld [vmem:[#allocation6 + $0x88] sm:$0xff]
    %v1880 = vld [vmem:[#allocation6 + $0x90] sm:$0xff]
    %v1881 = vld [vmem:[#allocation6 + $0x98] sm:$0xff]
    %v1882 = vld [vmem:[#allocation6 + $0xa0] sm:$0xff]
    %v1883 = vld [vmem:[#allocation6 + $0xa8] sm:$0xff]
    %v1884 = vld [vmem:[#allocation6 + $0xb0] sm:$0xff]
    %v1885 = vld [vmem:[#allocation6 + $0xb8] sm:$0xff]
    %v1886 = vld [vmem:[#allocation6 + $0xc0] sm:$0xff]
    %v1887 = vld [vmem:[#allocation6 + $0xc8] sm:$0xff]
    %v1888 = vld [vmem:[#allocation6 + $0xd0] sm:$0xff]
    %v1889 = vld [vmem:[#allocation6 + $0xd8] sm:$0xff]
    %v1890 = vld [vmem:[#allocation6 + $0xe0] sm:$0xff]
    %v1891 = vld [vmem:[#allocation6 + $0xe8] sm:$0xff]
    %v1892 = vld [vmem:[#allocation6 + $0xf0] sm:$0xff]
    %v1893 = vld [vmem:[#allocation6 + $0xf8] sm:$0xff]
    %v1894 = vld [vmem:[#allocation6 + $0x100] sm:$0xff]
    %v1895 = vld [vmem:[#allocation6 + $0x108] sm:$0xff]
    %v1896 = vld [vmem:[#allocation6 + $0x110] sm:$0xff]
    %v1897 = vld [vmem:[#allocation6 + $0x118] sm:$0xff]
    %v1898 = vld [vmem:[#allocation6 + $0x120] sm:$0xff]
    %v1899 = vld [vmem:[#allocation6 + $0x128] sm:$0xff]
    %v1900 = vld [vmem:[#allocation6 + $0x130] sm:$0xff]
    %v1901 = vld [vmem:[#allocation6 + $0x138] sm:$0xff]
    %v1902 = vld [vmem:[#allocation6 + $0x140] sm:$0xff]
    %v1903 = vld [vmem:[#allocation6 + $0x148] sm:$0xff]
    %v1904 = vld [vmem:[#allocation6 + $0x150] sm:$0xff]
    %v1905 = vld [vmem:[#allocation6 + $0x158] sm:$0xff]
    %v1906 = vld [vmem:[#allocation6 + $0x160] sm:$0xff]
    %v1907 = vld [vmem:[#allocation6 + $0x168] sm:$0xff]
    %v1908 = vld [vmem:[#allocation6 + $0x170] sm:$0xff]
    %v1909 = vld [vmem:[#allocation6 + $0x178] sm:$0xff]
    %v1910 = vld [vmem:[#allocation6 + $0x180] sm:$0xff]
    %v1911 = vld [vmem:[#allocation6 + $0x188] sm:$0xff]
    %v1912 = vld [vmem:[#allocation6 + $0x190] sm:$0xff]
    %v1913 = vld [vmem:[#allocation6 + $0x198] sm:$0xff]
    %v1914 = vld [vmem:[#allocation6 + $0x1a0] sm:$0xff]
    %v1915 = vld [vmem:[#allocation6 + $0x1a8] sm:$0xff]
    %v1916 = vld [vmem:[#allocation6 + $0x1b0] sm:$0xff]
    %v1917 = vld [vmem:[#allocation6 + $0x1b8] sm:$0xff]
    %v1918 = vld [vmem:[#allocation6 + $0x1c0] sm:$0xff]
    %v1919 = vld [vmem:[#allocation6 + $0x1c8] sm:$0xff]
    %v1920 = vld [vmem:[#allocation6 + $0x1d0] sm:$0xff]
    %v1921 = vld [vmem:[#allocation6 + $0x1d8] sm:$0xff]
    %v1922 = vld [vmem:[#allocation6 + $0x1e0] sm:$0xff]
    %v1923 = vld [vmem:[#allocation6 + $0x1e8] sm:$0xff]
    %v1924 = vld [vmem:[#allocation6 + $0x1f0] sm:$0xff]
    %v1925 = vld [vmem:[#allocation6 + $0x1f8] sm:$0xff]
    %v1926 = vld [vmem:[%s11] sm:$0x3]
    %v1928 = vlaneseq
    %v1929 = vshrl.u32 %v1928, 7
    %v1930 = vsub.s32 0, %v1929
    %v1931 = vrot.slane %v1926, %v1930
    %v1932 = vlaneseq
    %v1933 = vshrl.u32 %v1932, 7
    %v1934 = vsub.s32 1, %v1933
    %v1935 = vrot.slane %v1926, %v1934
    %v2002 = vunpack.c.l.b16 %v1862
    %v2003 = vunpack.c.h.b16 %v1862
    %v2004 = vunpack.c.l.b16 %v1863
    %v2005 = vunpack.c.h.b16 %v1863
    %v2006 = vunpack.c.l.b16 %v1864
    %v2007 = vunpack.c.h.b16 %v1864
    %v2008 = vunpack.c.l.b16 %v1865
    %v2009 = vunpack.c.h.b16 %v1865
    %v2010 = vunpack.c.l.b16 %v1866
    %v2011 = vunpack.c.h.b16 %v1866
    %v2012 = vunpack.c.l.b16 %v1867
    %v2013 = vunpack.c.h.b16 %v1867
    %v2014 = vunpack.c.l.b16 %v1868
    %v2015 = vunpack.c.h.b16 %v1868
    %v2016 = vunpack.c.l.b16 %v1869
    %v2017 = vunpack.c.h.b16 %v1869
    %v2018 = vunpack.c.l.b16 %v1870
    %v2019 = vunpack.c.h.b16 %v1870
    %v2020 = vunpack.c.l.b16 %v1871
    %v2021 = vunpack.c.h.b16 %v1871
    %v2022 = vunpack.c.l.b16 %v1872
    %v2023 = vunpack.c.h.b16 %v1872
    %v2024 = vunpack.c.l.b16 %v1873
    %v2025 = vunpack.c.h.b16 %v1873
    %v2026 = vunpack.c.l.b16 %v1874
    %v2027 = vunpack.c.h.b16 %v1874
    %v2028 = vunpack.c.l.b16 %v1875
    %v2029 = vunpack.c.h.b16 %v1875
    %v2030 = vunpack.c.l.b16 %v1876
    %v2031 = vunpack.c.h.b16 %v1876
    %v2032 = vunpack.c.l.b16 %v1877
    %v2033 = vunpack.c.h.b16 %v1877
    %v2034 = vunpack.c.l.b16 %v1878
    %v2035 = vunpack.c.h.b16 %v1878
    %v2036 = vunpack.c.l.b16 %v1879
    %v2037 = vunpack.c.h.b16 %v1879
    %v2038 = vunpack.c.l.b16 %v1880
    %v2039 = vunpack.c.h.b16 %v1880
    %v2040 = vunpack.c.l.b16 %v1881
    %v2041 = vunpack.c.h.b16 %v1881
    %v2042 = vunpack.c.l.b16 %v1882
    %v2043 = vunpack.c.h.b16 %v1882
    %v2044 = vunpack.c.l.b16 %v1883
    %v2045 = vunpack.c.h.b16 %v1883
    %v2046 = vunpack.c.l.b16 %v1884
    %v2047 = vunpack.c.h.b16 %v1884
    %v2048 = vunpack.c.l.b16 %v1885
    %v2049 = vunpack.c.h.b16 %v1885
    %v2050 = vunpack.c.l.b16 %v1886
    %v2051 = vunpack.c.h.b16 %v1886
    %v2052 = vunpack.c.l.b16 %v1887
    %v2053 = vunpack.c.h.b16 %v1887
    %v2054 = vunpack.c.l.b16 %v1888
    %v2055 = vunpack.c.h.b16 %v1888
    %v2056 = vunpack.c.l.b16 %v1889
    %v2057 = vunpack.c.h.b16 %v1889
    %v2058 = vunpack.c.l.b16 %v1890
    %v2059 = vunpack.c.h.b16 %v1890
    %v2060 = vunpack.c.l.b16 %v1891
    %v2061 = vunpack.c.h.b16 %v1891
    %v2062 = vunpack.c.l.b16 %v1892
    %v2063 = vunpack.c.h.b16 %v1892
    %v2064 = vunpack.c.l.b16 %v1893
    %v2065 = vunpack.c.h.b16 %v1893
    %v2066 = vunpack.c.l.b16 %v1894
    %v2067 = vunpack.c.h.b16 %v1894
    %v2068 = vunpack.c.l.b16 %v1895
    %v2069 = vunpack.c.h.b16 %v1895
    %v2070 = vunpack.c.l.b16 %v1896
    %v2071 = vunpack.c.h.b16 %v1896
    %v2072 = vunpack.c.l.b16 %v1897
    %v2073 = vunpack.c.h.b16 %v1897
    %v2074 = vunpack.c.l.b16 %v1898
    %v2075 = vunpack.c.h.b16 %v1898
    %v2076 = vunpack.c.l.b16 %v1899
    %v2077 = vunpack.c.h.b16 %v1899
    %v2078 = vunpack.c.l.b16 %v1900
    %v2079 = vunpack.c.h.b16 %v1900
    %v2080 = vunpack.c.l.b16 %v1901
    %v2081 = vunpack.c.h.b16 %v1901
    %v2082 = vunpack.c.l.b16 %v1902
    %v2083 = vunpack.c.h.b16 %v1902
    %v2084 = vunpack.c.l.b16 %v1903
    %v2085 = vunpack.c.h.b16 %v1903
    %v2086 = vunpack.c.l.b16 %v1904
    %v2087 = vunpack.c.h.b16 %v1904
    %v2088 = vunpack.c.l.b16 %v1905
    %v2089 = vunpack.c.h.b16 %v1905
    %v2090 = vunpack.c.l.b16 %v1906
    %v2091 = vunpack.c.h.b16 %v1906
    %v2092 = vunpack.c.l.b16 %v1907
    %v2093 = vunpack.c.h.b16 %v1907
    %v2094 = vunpack.c.l.b16 %v1908
    %v2095 = vunpack.c.h.b16 %v1908
    %v2096 = vunpack.c.l.b16 %v1909
    %v2097 = vunpack.c.h.b16 %v1909
    %v2098 = vunpack.c.l.b16 %v1910
    %v2099 = vunpack.c.h.b16 %v1910
    %v2100 = vunpack.c.l.b16 %v1911
    %v2101 = vunpack.c.h.b16 %v1911
    %v2102 = vunpack.c.l.b16 %v1912
    %v2103 = vunpack.c.h.b16 %v1912
    %v2104 = vunpack.c.l.b16 %v1913
    %v2105 = vunpack.c.h.b16 %v1913
    %v2106 = vunpack.c.l.b16 %v1914
    %v2107 = vunpack.c.h.b16 %v1914
    %v2108 = vunpack.c.l.b16 %v1915
    %v2109 = vunpack.c.h.b16 %v1915
    %v2110 = vunpack.c.l.b16 %v1916
    %v2111 = vunpack.c.h.b16 %v1916
    %v2112 = vunpack.c.l.b16 %v1917
    %v2113 = vunpack.c.h.b16 %v1917
    %v2114 = vunpack.c.l.b16 %v1918
    %v2115 = vunpack.c.h.b16 %v1918
    %v2116 = vunpack.c.l.b16 %v1919
    %v2117 = vunpack.c.h.b16 %v1919
    %v2118 = vunpack.c.l.b16 %v1920
    %v2119 = vunpack.c.h.b16 %v1920
    %v2120 = vunpack.c.l.b16 %v1921
    %v2121 = vunpack.c.h.b16 %v1921
    %v2122 = vunpack.c.l.b16 %v1922
    %v2123 = vunpack.c.h.b16 %v1922
    %v2124 = vunpack.c.l.b16 %v1923
    %v2125 = vunpack.c.h.b16 %v1923
    %v2126 = vunpack.c.l.b16 %v1924
    %v2127 = vunpack.c.h.b16 %v1924
    %v2128 = vunpack.c.l.b16 %v1925
    %v2129 = vunpack.c.h.b16 %v1925
    %v2130 = vpack.c.b16 %v2004, %v2002
    %v2131 = vpack.c.b16 %v2005, %v2003
    %v2132 = vpack.c.b16 %v2008, %v2006
    %v2133 = vpack.c.b16 %v2009, %v2007
    %v2134 = vpack.c.b16 %v2012, %v2010
    %v2135 = vpack.c.b16 %v2013, %v2011
    %v2136 = vpack.c.b16 %v2016, %v2014
    %v2137 = vpack.c.b16 %v2017, %v2015
    %v2138 = vpack.c.b16 %v2020, %v2018
    %v2139 = vpack.c.b16 %v2021, %v2019
    %v2140 = vpack.c.b16 %v2024, %v2022
    %v2141 = vpack.c.b16 %v2025, %v2023
    %v2142 = vpack.c.b16 %v2028, %v2026
    %v2143 = vpack.c.b16 %v2029, %v2027
    %v2144 = vpack.c.b16 %v2032, %v2030
    %v2145 = vpack.c.b16 %v2033, %v2031
    %v2146 = vpack.c.b16 %v2036, %v2034
    %v2147 = vpack.c.b16 %v2037, %v2035
    %v2148 = vpack.c.b16 %v2040, %v2038
    %v2149 = vpack.c.b16 %v2041, %v2039
    %v2150 = vpack.c.b16 %v2044, %v2042
    %v2151 = vpack.c.b16 %v2045, %v2043
    %v2152 = vpack.c.b16 %v2048, %v2046
    %v2153 = vpack.c.b16 %v2049, %v2047
    %v2154 = vpack.c.b16 %v2052, %v2050
    %v2155 = vpack.c.b16 %v2053, %v2051
    %v2156 = vpack.c.b16 %v2056, %v2054
    %v2157 = vpack.c.b16 %v2057, %v2055
    %v2158 = vpack.c.b16 %v2060, %v2058
    %v2159 = vpack.c.b16 %v2061, %v2059
    %v2160 = vpack.c.b16 %v2064, %v2062
    %v2161 = vpack.c.b16 %v2065, %v2063
    %v2162 = vpack.c.b16 %v2068, %v2066
    %v2163 = vpack.c.b16 %v2069, %v2067
    %v2164 = vpack.c.b16 %v2072, %v2070
    %v2165 = vpack.c.b16 %v2073, %v2071
    %v2166 = vpack.c.b16 %v2076, %v2074
    %v2167 = vpack.c.b16 %v2077, %v2075
    %v2168 = vpack.c.b16 %v2080, %v2078
    %v2169 = vpack.c.b16 %v2081, %v2079
    %v2170 = vpack.c.b16 %v2084, %v2082
    %v2171 = vpack.c.b16 %v2085, %v2083
    %v2172 = vpack.c.b16 %v2088, %v2086
    %v2173 = vpack.c.b16 %v2089, %v2087
    %v2174 = vpack.c.b16 %v2092, %v2090
    %v2175 = vpack.c.b16 %v2093, %v2091
    %v2176 = vpack.c.b16 %v2096, %v2094
    %v2177 = vpack.c.b16 %v2097, %v2095
    %v2178 = vpack.c.b16 %v2100, %v2098
    %v2179 = vpack.c.b16 %v2101, %v2099
    %v2180 = vpack.c.b16 %v2104, %v2102
    %v2181 = vpack.c.b16 %v2105, %v2103
    %v2182 = vpack.c.b16 %v2108, %v2106
    %v2183 = vpack.c.b16 %v2109, %v2107
    %v2184 = vpack.c.b16 %v2112, %v2110
    %v2185 = vpack.c.b16 %v2113, %v2111
    %v2186 = vpack.c.b16 %v2116, %v2114
    %v2187 = vpack.c.b16 %v2117, %v2115
    %v2188 = vpack.c.b16 %v2120, %v2118
    %v2189 = vpack.c.b16 %v2121, %v2119
    %v2190 = vpack.c.b16 %v2124, %v2122
    %v2191 = vpack.c.b16 %v2125, %v2123
    %v2192 = vpack.c.b16 %v2128, %v2126
    %v2193 = vpack.c.b16 %v2129, %v2127
    %2258 = vmatprep.subr.bf16.mxu0 %v2131
    %2259 = vmatpush1.bf16.msra.mxu0 %v2130
    %2260 = vmatprep.subr.bf16.mxu0 %v2133
    %2261 = vmatpush1.bf16.msra.mxu0 %v2132
    %2262 = vmatprep.subr.bf16.mxu0 %v2135
    %2263 = vmatpush1.bf16.msra.mxu0 %v2134
    %2264 = vmatprep.subr.bf16.mxu0 %v2137
    %2265 = vmatpush1.bf16.msra.mxu0 %v2136
    %2266 = vmatprep.subr.bf16.mxu0 %v2139
    %2267 = vmatpush1.bf16.msra.mxu0 %v2138
    %2268 = vmatprep.subr.bf16.mxu0 %v2141
    %2269 = vmatpush1.bf16.msra.mxu0 %v2140
    %2270 = vmatprep.subr.bf16.mxu0 %v2143
    %2271 = vmatpush1.bf16.msra.mxu0 %v2142
    %2272 = vmatprep.subr.bf16.mxu0 %v2145
    %2273 = vmatpush1.bf16.msra.mxu0 %v2144
    %2274 = vmatprep.subr.bf16.mxu0 %v2147
    %2275 = vmatpush1.bf16.msra.mxu0 %v2146
    %2276 = vmatprep.subr.bf16.mxu0 %v2149
    %2277 = vmatpush1.bf16.msra.mxu0 %v2148
    %2278 = vmatprep.subr.bf16.mxu0 %v2151
    %2279 = vmatpush1.bf16.msra.mxu0 %v2150
    %2280 = vmatprep.subr.bf16.mxu0 %v2153
    %2281 = vmatpush1.bf16.msra.mxu0 %v2152
    %2282 = vmatprep.subr.bf16.mxu0 %v2155
    %2283 = vmatpush1.bf16.msra.mxu0 %v2154
    %2284 = vmatprep.subr.bf16.mxu0 %v2157
    %2285 = vmatpush1.bf16.msra.mxu0 %v2156
    %2286 = vmatprep.subr.bf16.mxu0 %v2159
    %2287 = vmatpush1.bf16.msra.mxu0 %v2158
    %2288 = vmatprep.subr.bf16.mxu0 %v2161
    %2289 = vmatpush1.bf16.msra.mxu0 %v2160
    %2290 = vmatprep.mubr.bf16.mxu0 %v1859
    %2291 = vmatmul.mubr.bf16.gmra.mrb[0].mxu0 %v1858
    %v2292 = vpop.f32.mrb[0].mxu0
    %v2293 = vadd.f32 %v1931, %v2292
    %v2294 = vpop.f32.mrb[0].mxu0
    %v2295 = vadd.f32 %v1935, %v2294
    %v2296 = vpop.f32.mrb[0].mxu0
    %v2297 = vpop.f32.mrb[0].mxu0
    %2298 = vdwg.mxu0
    %2299 = vmatprep.subr.bf16.mxu0 %v2163
    %2300 = vmatpush1.bf16.msra.mxu0 %v2162
    %2301 = vmatprep.subr.bf16.mxu0 %v2165
    %2302 = vmatpush1.bf16.msra.mxu0 %v2164
    %2303 = vmatprep.subr.bf16.mxu0 %v2167
    %2304 = vmatpush1.bf16.msra.mxu0 %v2166
    %2305 = vmatprep.subr.bf16.mxu0 %v2169
    %2306 = vmatpush1.bf16.msra.mxu0 %v2168
    %2307 = vmatprep.subr.bf16.mxu0 %v2171
    %2308 = vmatpush1.bf16.msra.mxu0 %v2170
    %2309 = vmatprep.subr.bf16.mxu0 %v2173
    %2310 = vmatpush1.bf16.msra.mxu0 %v2172
    %2311 = vmatprep.subr.bf16.mxu0 %v2175
    %2312 = vmatpush1.bf16.msra.mxu0 %v2174
    %2313 = vmatprep.subr.bf16.mxu0 %v2177
    %2314 = vmatpush1.bf16.msra.mxu0 %v2176
    %2315 = vmatprep.subr.bf16.mxu0 %v2179
    %2316 = vmatpush1.bf16.msra.mxu0 %v2178
    %2317 = vmatprep.subr.bf16.mxu0 %v2181
    %2318 = vmatpush1.bf16.msra.mxu0 %v2180
    %2319 = vmatprep.subr.bf16.mxu0 %v2183
    %2320 = vmatpush1.bf16.msra.mxu0 %v2182
    %2321 = vmatprep.subr.bf16.mxu0 %v2185
    %2322 = vmatpush1.bf16.msra.mxu0 %v2184
    %2323 = vmatprep.subr.bf16.mxu0 %v2187
    %2324 = vmatpush1.bf16.msra.mxu0 %v2186
    %2325 = vmatprep.subr.bf16.mxu0 %v2189
    %2326 = vmatpush1.bf16.msra.mxu0 %v2188
    %2327 = vmatprep.subr.bf16.mxu0 %v2191
    %2328 = vmatpush1.bf16.msra.mxu0 %v2190
    %2329 = vmatprep.subr.bf16.mxu0 %v2193
    %2330 = vmatpush1.bf16.msra.mxu0 %v2192
    %2331 = vmatprep.mubr.bf16.mxu0 %v1861
    %2332 = vmatmul.mubr.bf16.gmra.mrb[0].mxu0 %v1860
    %v2333 = vpop.f32.mrb[0].mxu0
    %v2334 = vadd.f32 %v2293, %v2333
    %v2335 = vpop.f32.mrb[0].mxu0
    %v2336 = vadd.f32 %v2295, %v2335
    %v2337 = vpop.f32.mrb[0].mxu0
    %v2338 = vpop.f32.mrb[0].mxu0
    %2339 = vdwg.mxu0
    %vm2340 = vcmp.ge.f32.partialorder %v2334, 0.0
    %vm2341 = vcmp.ge.f32.partialorder %v2336, 0.0
    %v2342 = vmul.f32 %v2334, 0.01
    %v2343 = vmul.f32 %v2336, 0.01
    %v2344 = vsel %vm2340, %v2334, %v2342
    %v2345 = vsel %vm2341, %v2336, %v2343
    %v2346 = vpack.c.bf16 %v2344, %v2344
    %v2347 = vpack.c.bf16 %v2345, %v2345
    %v2348 = vld [vmem:[#allocation9] sm:$0xf]
    %v2349 = vld [vmem:[#allocation9 + $0x4] sm:$0xf]
    %v2350 = vld [vmem:[#allocation9 + $0x8] sm:$0xf]
    %v2351 = vld [vmem:[#allocation9 + $0xc] sm:$0xf]
    %v2352 = vld [vmem:[#allocation9 + $0x10] sm:$0xf]
    %v2353 = vld [vmem:[#allocation9 + $0x14] sm:$0xf]
    %v2354 = vld [vmem:[#allocation9 + $0x18] sm:$0xf]
    %v2355 = vld [vmem:[#allocation9 + $0x1c] sm:$0xf]
    %v2356 = vld [vmem:[#allocation9 + $0x20] sm:$0xf]
    %v2357 = vld [vmem:[#allocation9 + $0x24] sm:$0xf]
    %v2358 = vld [vmem:[#allocation9 + $0x28] sm:$0xf]
    %v2359 = vld [vmem:[#allocation9 + $0x2c] sm:$0xf]
    %v2360 = vld [vmem:[#allocation9 + $0x30] sm:$0xf]
    %v2361 = vld [vmem:[#allocation9 + $0x34] sm:$0xf]
    %v2362 = vld [vmem:[#allocation9 + $0x38] sm:$0xf]
    %v2363 = vld [vmem:[#allocation9 + $0x3c] sm:$0xf]
    %v2364 = vld [vmem:[#allocation9 + $0x40] sm:$0xf]
    %v2365 = vld [vmem:[#allocation9 + $0x44] sm:$0xf]
    %v2366 = vld [vmem:[#allocation9 + $0x48] sm:$0xf]
    %v2367 = vld [vmem:[#allocation9 + $0x4c] sm:$0xf]
    %v2368 = vld [vmem:[#allocation9 + $0x50] sm:$0xf]
    %v2369 = vld [vmem:[#allocation9 + $0x54] sm:$0xf]
    %v2370 = vld [vmem:[#allocation9 + $0x58] sm:$0xf]
    %v2371 = vld [vmem:[#allocation9 + $0x5c] sm:$0xf]
    %v2372 = vld [vmem:[#allocation9 + $0x60] sm:$0xf]
    %v2373 = vld [vmem:[#allocation9 + $0x64] sm:$0xf]
    %v2374 = vld [vmem:[#allocation9 + $0x68] sm:$0xf]
    %v2375 = vld [vmem:[#allocation9 + $0x6c] sm:$0xf]
    %v2376 = vld [vmem:[#allocation9 + $0x70] sm:$0xf]
    %v2377 = vld [vmem:[#allocation9 + $0x74] sm:$0xf]
    %v2378 = vld [vmem:[#allocation9 + $0x78] sm:$0xf]
    %v2379 = vld [vmem:[#allocation9 + $0x7c] sm:$0xf]
    %v2380 = vld [vmem:[%s13] sm:$0x1]
    %v2382 = vlaneseq
    %v2383 = vshrl.u32 %v2382, 7
    %v2384 = vsub.s32 0, %v2383
    %v2385 = vrot.slane %v2380, %v2384
    %v2419 = vunpack.c.l.b16 %v2348
    %v2420 = vunpack.c.l.b16 %v2349
    %v2421 = vunpack.c.l.b16 %v2350
    %v2422 = vunpack.c.l.b16 %v2351
    %v2423 = vunpack.c.l.b16 %v2352
    %v2424 = vunpack.c.l.b16 %v2353
    %v2425 = vunpack.c.l.b16 %v2354
    %v2426 = vunpack.c.l.b16 %v2355
    %v2427 = vunpack.c.l.b16 %v2356
    %v2428 = vunpack.c.l.b16 %v2357
    %v2429 = vunpack.c.l.b16 %v2358
    %v2430 = vunpack.c.l.b16 %v2359
    %v2431 = vunpack.c.l.b16 %v2360
    %v2432 = vunpack.c.l.b16 %v2361
    %v2433 = vunpack.c.l.b16 %v2362
    %v2434 = vunpack.c.l.b16 %v2363
    %v2435 = vunpack.c.l.b16 %v2364
    %v2436 = vunpack.c.l.b16 %v2365
    %v2437 = vunpack.c.l.b16 %v2366
    %v2438 = vunpack.c.l.b16 %v2367
    %v2439 = vunpack.c.l.b16 %v2368
    %v2440 = vunpack.c.l.b16 %v2369
    %v2441 = vunpack.c.l.b16 %v2370
    %v2442 = vunpack.c.l.b16 %v2371
    %v2443 = vunpack.c.l.b16 %v2372
    %v2444 = vunpack.c.l.b16 %v2373
    %v2445 = vunpack.c.l.b16 %v2374
    %v2446 = vunpack.c.l.b16 %v2375
    %v2447 = vunpack.c.l.b16 %v2376
    %v2448 = vunpack.c.l.b16 %v2377
    %v2449 = vunpack.c.l.b16 %v2378
    %v2450 = vunpack.c.l.b16 %v2379
    %v2451 = vpack.c.b16 %v2420, %v2419
    %v2452 = vpack.c.b16 %v2422, %v2421
    %v2453 = vpack.c.b16 %v2424, %v2423
    %v2454 = vpack.c.b16 %v2426, %v2425
    %v2455 = vpack.c.b16 %v2428, %v2427
    %v2456 = vpack.c.b16 %v2430, %v2429
    %v2457 = vpack.c.b16 %v2432, %v2431
    %v2458 = vpack.c.b16 %v2434, %v2433
    %v2459 = vpack.c.b16 %v2436, %v2435
    %v2460 = vpack.c.b16 %v2438, %v2437
    %v2461 = vpack.c.b16 %v2440, %v2439
    %v2462 = vpack.c.b16 %v2442, %v2441
    %v2463 = vpack.c.b16 %v2444, %v2443
    %v2464 = vpack.c.b16 %v2446, %v2445
    %v2465 = vpack.c.b16 %v2448, %v2447
    %v2466 = vpack.c.b16 %v2450, %v2449
    %2483 = vmatprep.subr.bf16.mxu0 0
    %2484 = vmatpush1.bf16.msra.mxu0 %v2451
    %2485 = vmatprep.subr.bf16.mxu0 0
    %2486 = vmatpush1.bf16.msra.mxu0 %v2452
    %2487 = vmatprep.subr.bf16.mxu0 0
    %2488 = vmatpush1.bf16.msra.mxu0 %v2453
    %2489 = vmatprep.subr.bf16.mxu0 0
    %2490 = vmatpush1.bf16.msra.mxu0 %v2454
    %2491 = vmatprep.subr.bf16.mxu0 0
    %2492 = vmatpush1.bf16.msra.mxu0 %v2455
    %2493 = vmatprep.subr.bf16.mxu0 0
    %2494 = vmatpush1.bf16.msra.mxu0 %v2456
    %2495 = vmatprep.subr.bf16.mxu0 0
    %2496 = vmatpush1.bf16.msra.mxu0 %v2457
    %2497 = vmatprep.subr.bf16.mxu0 0
    %2498 = vmatpush1.bf16.msra.mxu0 %v2458
    %2499 = vmatprep.subr.bf16.mxu0 0
    %2500 = vmatpush1.bf16.msra.mxu0 %v2459
    %2501 = vmatprep.subr.bf16.mxu0 0
    %2502 = vmatpush1.bf16.msra.mxu0 %v2460
    %2503 = vmatprep.subr.bf16.mxu0 0
    %2504 = vmatpush1.bf16.msra.mxu0 %v2461
    %2505 = vmatprep.subr.bf16.mxu0 0
    %2506 = vmatpush1.bf16.msra.mxu0 %v2462
    %2507 = vmatprep.subr.bf16.mxu0 0
    %2508 = vmatpush1.bf16.msra.mxu0 %v2463
    %2509 = vmatprep.subr.bf16.mxu0 0
    %2510 = vmatpush1.bf16.msra.mxu0 %v2464
    %2511 = vmatprep.subr.bf16.mxu0 0
    %2512 = vmatpush1.bf16.msra.mxu0 %v2465
    %2513 = vmatprep.subr.bf16.mxu0 0
    %2514 = vmatpush1.bf16.msra.mxu0 %v2466
    %2515 = vmatprep.mubr.bf16.mxu0 %v2347
    %2516 = vmatmul.mubr.bf16.gmra.mrb[0].mxu0 %v2346
    %v2517 = vpop.f32.mrb[0].mxu0
    %v2518 = vadd.f32 %v2385, %v2517
    %v2519 = vpop.f32.mrb[0].mxu0
    %v2520 = vpop.f32.mrb[0].mxu0
    %v2521 = vpop.f32.mrb[0].mxu0
    %2522 = vdwg.mxu0
    %2523 = vst [vmem:[#allocation11] sm:$0x3] %v2518
    // Predicated region
    $region66: #{language_classifier_forward.1} parent=1 // pred_check
      _
    $region67: #{language_classifier_forward.1} parent=1 // pred_check_branch
      %2525 = sbr.rel (0) target = $region69
    $region68: #{language_classifier_forward.1} parent=1 // pred_region
      %s2527 = ssub.s32 32, 32
      %2528 = vsyncadd [#allocation8], %s2527
      %s2530 = sshll.u32 [#allocation11], 4
      %s2531 = int_to_ptr.vmem [resolvable:$true] %s2530
      %2533 = dma.vmem_to_hbm [thread:$0]  %s2531, 32, %s14, [#allocation8]
    $region69: #{language_classifier_forward.1} parent=1 // pred_fallthru
      _
    // Predicated region
    $region70: #{language_classifier_forward.1} parent=1 // pred_check
      _
    $region71: #{language_classifier_forward.1} parent=1 // pred_check_branch
      %2535 = sbr.rel (0) target = $region73
    $region72: #{language_classifier_forward.1} parent=1 // pred_region
      %2536 = dma.done [#allocation8], 32
    $region73: #{language_classifier_forward.1} parent=1 // pred_fallthru
      _
    %2537 = vsyncpa [#allocation7], 1
    %2538 = vsyncpa [#allocation10], 1
    %2539 = vsyncpa [#allocation8], 1

</llo_original>
